<compile_context>
chip_gen: v7x
topology: tpu7x:2x2x1
jax: 0.10.0
libtpu: 0.0.40
codegen_flags: <defaults>
</compile_context>

<pallas_src>
import functools

import numpy as np
import jax
import jax.numpy as jnp
from jax.experimental import pallas as pl
from jax.experimental.pallas import tpu as pltpu


def _warp_kernel(mx_ref, my_ref, fx_ref, fy_ref, img1_ref, img2_ref,
                 out1_ref, out2_ref, *, H, W):
    # Refs (leading batch dim squeezed away by BlockSpec):
    #   mx/my/fx/fy : (1, T)    lane-dense destination-pixel tile
    #   img1        : (C, T)    destination tile of img1
    #   img2        : (C, HW)   full flattened source image
    #   out1/out2   : (C, T)
    C, HW = img2_ref.shape
    _, T = fx_ref.shape

    mesh_x = mx_ref[...]          # (1, T)
    mesh_y = my_ref[...]
    fx = fx_ref[...]
    fy = fy_ref[...]

    # normalized grid in [-1, 1] (same expressions as the PyTorch module / ref)
    gx = (mesh_x + fx) / W * 2.0 - 1.0
    gy = (mesh_y + fy) / H * 2.0 - 1.0
    # unnormalize, grid_sample(align_corners=False): ix = ((x + 1) * W - 1) / 2
    sx = ((gx + 1.0) * W - 1.0) * 0.5
    sy = ((gy + 1.0) * H - 1.0) * 0.5

    x0f = jnp.floor(sx)
    y0f = jnp.floor(sy)
    wx1 = sx - x0f
    wx0 = 1.0 - wx1
    wy1 = sy - y0f
    wy0 = 1.0 - wy1
    x0 = x0f.astype(jnp.int32)
    y0 = y0f.astype(jnp.int32)
    x1 = x0 + 1
    y1 = y0 + 1

    inx0 = (x0 >= 0) & (x0 < W)
    inx1 = (x1 >= 0) & (x1 < W)
    iny0 = (y0 >= 0) & (y0 < H)
    iny1 = (y1 >= 0) & (y1 < H)

    # in-bounds bilinear corner weights (padding_mode='zeros')
    w00 = jnp.where(iny0 & inx0, wy0 * wx0, 0.0)      # (1, T)
    w01 = jnp.where(iny0 & inx1, wy0 * wx1, 0.0)
    w10 = jnp.where(iny1 & inx0, wy1 * wx0, 0.0)
    w11 = jnp.where(iny1 & inx1, wy1 * wx1, 0.0)

    # mask = grid_sample(ones) = sum of in-bounds weights (O(HW), no Wmat reduce)
    mask = w00 + w01 + w10 + w11                      # (1, T)

    # out1 = img1 * mask  (independent of the scatter matrix -> store early)
    out1_ref[...] = (img1_ref[...] * mask).astype(out1_ref.dtype)

    # One-hot scatter matrix for this destination tile, fused over the 4
    # corners via the shared displacement d = q - idx00.  OOB corners already
    # have zero weight, so aliasing from the unclipped idx00 contributes 0.
    idx00 = y0 * W + x0                               # (1, T) int32, unclipped
    q = jax.lax.broadcasted_iota(jnp.int32, (HW, T), 0)
    d = q - idx00                                     # (HW, T)
    wmat = (jnp.where(d == 0, w00, 0.0)
            + jnp.where(d == 1, w01, 0.0)
            + jnp.where(d == W, w10, 0.0)
            + jnp.where(d == W + 1, w11, 0.0))        # (HW, T)

    warped2 = jnp.dot(img2_ref[...], wmat, preferred_element_type=jnp.float32)
    out2_ref[...] = (warped2 * mask).astype(out2_ref.dtype)


def _pick_dst_tile(hw):
    for t in (512, 256, 128):
        if hw % t == 0:
            return t
    return hw


def warp(img1, img2, flo):
    """Pallas equivalent of Warp(N, H, W)(img1, img2, flo).

    img1, img2: (N, C, H, W) float32; flo: (N, H, W, 2) float32.
    Returns (img1 * mask, grid_sample(img2, grid) * mask), both (N, C, H, W).
    """
    N, C, H, W = img1.shape
    HW = H * W
    T = _pick_dst_tile(HW)
    n_t = HW // T

    # Lane-dense flattening done in the wrapper (free HBM layout change).
    img1_f = img1.reshape(N, C, HW)
    img2_f = img2.reshape(N, C, HW)
    fx = flo[..., 0].reshape(N, 1, HW)
    fy = flo[..., 1].reshape(N, 1, HW)

    # meshgrid exactly as create_meshgrid(): np.linspace(0, W, W) etc.
    X, Y = np.meshgrid(np.linspace(0.0, W, W), np.linspace(0.0, H, H))
    mesh_x = jnp.asarray(X.reshape(1, HW), dtype=jnp.float32)
    mesh_y = jnp.asarray(Y.reshape(1, HW), dtype=jnp.float32)

    mesh_spec = pl.BlockSpec((1, T), lambda b, t: (0, t))
    flo_spec = pl.BlockSpec((pl.Squeezed(), 1, T), lambda b, t: (b, 0, t))
    img_dst_spec = pl.BlockSpec((pl.Squeezed(), C, T), lambda b, t: (b, 0, t))
    img_src_spec = pl.BlockSpec((pl.Squeezed(), C, HW), lambda b, t: (b, 0, 0))

    out_shape = (jax.ShapeDtypeStruct((N, C, HW), jnp.float32),
                 jax.ShapeDtypeStruct((N, C, HW), jnp.float32))

    kernel = functools.partial(_warp_kernel, H=H, W=W)

    out1, out2 = pl.pallas_call(
        kernel,
        out_shape=out_shape,
        grid_spec=pltpu.PrefetchScalarGridSpec(
            num_scalar_prefetch=0,
            grid=(N, n_t),
            in_specs=[mesh_spec, mesh_spec, flo_spec, flo_spec,
                      img_dst_spec, img_src_spec],
            out_specs=[img_dst_spec, img_dst_spec],
        ),
        compiler_params=pltpu.CompilerParams(
            dimension_semantics=("parallel", "parallel"),
            vmem_limit_bytes=32 * 1024 * 1024,
        ),
    )(mesh_x, mesh_y, fx, fy, img1_f, img2_f)

    return out1.reshape(N, C, H, W), out2.reshape(N, C, H, W)


def warp_ref(img1, img2, flo):
    """Pure-JAX reference (gather-based) of the same semantics."""
    N, C, H, W = img1.shape
    X, Y = np.meshgrid(np.linspace(0.0, W, W), np.linspace(0.0, H, H))
    mesh_x = jnp.asarray(X, dtype=jnp.float32)
    mesh_y = jnp.asarray(Y, dtype=jnp.float32)
    gx = (mesh_x[None] + flo[..., 0]) / W * 2.0 - 1.0
    gy = (mesh_y[None] + flo[..., 1]) / H * 2.0 - 1.0
    sx = ((gx + 1.0) * W - 1.0) * 0.5
    sy = ((gy + 1.0) * H - 1.0) * 0.5
    x0 = jnp.floor(sx)
    y0 = jnp.floor(sy)
    wx1 = sx - x0
    wy1 = sy - y0

    def samp(img, yi, xi, w):
        inb = (xi >= 0) & (xi < W) & (yi >= 0) & (yi < H)
        xi_c = jnp.clip(xi, 0, W - 1).astype(jnp.int32)
        yi_c = jnp.clip(yi, 0, H - 1).astype(jnp.int32)
        gathered = jax.vmap(lambda im, yy, xx: im[:, yy, xx])(img, yi_c, xi_c)
        return gathered * (w * inb)[:, None]

    def gs(img):
        return (samp(img, y0, x0, (1 - wy1) * (1 - wx1))
                + samp(img, y0, x0 + 1, (1 - wy1) * wx1)
                + samp(img, y0 + 1, x0, wy1 * (1 - wx1))
                + samp(img, y0 + 1, x0 + 1, wy1 * wx1))

    mask = gs(jnp.ones_like(img1))
    return img1 * mask, gs(img2) * mask


if __name__ == "__main__":
    key = jax.random.PRNGKey(0)
    N, C, H, W = 2, 4, 16, 16
    k1, k2, k3 = jax.random.split(key, 3)
    img1 = jax.random.normal(k1, (N, C, H, W), dtype=jnp.float32)
    img2 = jax.random.normal(k2, (N, C, H, W), dtype=jnp.float32)
    flo = jax.random.normal(k3, (N, H, W, 2), dtype=jnp.float32) * 2.0

    out1, out2 = warp(img1, img2, flo)
    jax.block_until_ready((out1, out2))

    ref1, ref2 = warp_ref(img1, img2, flo)
    np.testing.assert_allclose(np.asarray(out1), np.asarray(ref1), rtol=1e-4, atol=1e-4)
    np.testing.assert_allclose(np.asarray(out2), np.asarray(ref2), rtol=1e-4, atol=1e-4)

    print("KERNEL_OK")
</pallas_src>

<mosaic_0001>
module attributes {stable_mosaic.version = 11 : i64} {
  func.func @_warp_kernel(%arg0: i32, %arg1: i32, %arg2: memref<1x256xf32, #tpu.memory_space<vmem>>, %arg3: memref<1x256xf32, #tpu.memory_space<vmem>>, %arg4: memref<1x1x256xf32, #tpu.memory_space<vmem>>, %arg5: memref<1x1x256xf32, #tpu.memory_space<vmem>>, %arg6: memref<1x4x256xf32, #tpu.memory_space<vmem>>, %arg7: memref<1x4x256xf32, #tpu.memory_space<vmem>>, %arg8: memref<1x4x256xf32, #tpu.memory_space<vmem>>, %arg9: memref<1x4x256xf32, #tpu.memory_space<vmem>>) attributes {dimension_semantics = [#tpu.dimension_semantics<parallel>, #tpu.dimension_semantics<parallel>], iteration_bounds = array<i64: 2, 1>, scalar_prefetch = 0 : i64, scratch_operands = 0 : i64, tpu.core_type = #tpu.core_type<tc>, window_params = [{transform_indices = @transform_0, window_bounds = array<i64: 1, 256>}, {transform_indices = @transform_1, window_bounds = array<i64: 1, 256>}, {transform_indices = @transform_2, window_bounds = array<i64: 1, 1, 256>}, {transform_indices = @transform_3, window_bounds = array<i64: 1, 1, 256>}, {transform_indices = @transform_4, window_bounds = array<i64: 1, 4, 256>}, {transform_indices = @transform_5, window_bounds = array<i64: 1, 4, 256>}, {transform_indices = @transform_6, window_bounds = array<i64: 1, 4, 256>}, {transform_indices = @transform_7, window_bounds = array<i64: 1, 4, 256>}]} {
    %c0 = arith.constant 0 : index
    %c0_0 = arith.constant 0 : index
    %0 = vector.load %arg2[%c0, %c0_0] : memref<1x256xf32, #tpu.memory_space<vmem>>, vector<1x256xf32>
    %c0_1 = arith.constant 0 : index
    %c0_2 = arith.constant 0 : index
    %1 = vector.load %arg3[%c0_1, %c0_2] : memref<1x256xf32, #tpu.memory_space<vmem>>, vector<1x256xf32>
    %c0_3 = arith.constant 0 : index
    %c0_4 = arith.constant 0 : index
    %c0_5 = arith.constant 0 : index
    %2 = vector.load %arg4[%c0_3, %c0_4, %c0_5] : memref<1x1x256xf32, #tpu.memory_space<vmem>>, vector<1x1x256xf32>
    %3 = vector.shape_cast %2 : vector<1x1x256xf32> to vector<1x256xf32>
    %c0_6 = arith.constant 0 : index
    %c0_7 = arith.constant 0 : index
    %c0_8 = arith.constant 0 : index
    %4 = vector.load %arg5[%c0_6, %c0_7, %c0_8] : memref<1x1x256xf32, #tpu.memory_space<vmem>>, vector<1x1x256xf32>
    %5 = vector.shape_cast %4 : vector<1x1x256xf32> to vector<1x256xf32>
    %6 = arith.addf %0, %3 : vector<1x256xf32>
    %cst = arith.constant 1.600000e+01 : f32
    %7 = vector.broadcast %cst : f32 to vector<1x256xf32>
    %8 = arith.divf %6, %7 : vector<1x256xf32>
    %cst_9 = arith.constant 2.000000e+00 : f32
    %9 = vector.broadcast %cst_9 : f32 to vector<1x256xf32>
    %10 = arith.mulf %8, %9 : vector<1x256xf32>
    %cst_10 = arith.constant 1.000000e+00 : f32
    %11 = vector.broadcast %cst_10 : f32 to vector<1x256xf32>
    %12 = arith.subf %10, %11 : vector<1x256xf32>
    %13 = arith.addf %1, %5 : vector<1x256xf32>
    %cst_11 = arith.constant 1.600000e+01 : f32
    %14 = vector.broadcast %cst_11 : f32 to vector<1x256xf32>
    %15 = arith.divf %13, %14 : vector<1x256xf32>
    %cst_12 = arith.constant 2.000000e+00 : f32
    %16 = vector.broadcast %cst_12 : f32 to vector<1x256xf32>
    %17 = arith.mulf %15, %16 : vector<1x256xf32>
    %cst_13 = arith.constant 1.000000e+00 : f32
    %18 = vector.broadcast %cst_13 : f32 to vector<1x256xf32>
    %19 = arith.subf %17, %18 : vector<1x256xf32>
    %cst_14 = arith.constant 1.000000e+00 : f32
    %20 = vector.broadcast %cst_14 : f32 to vector<1x256xf32>
    %21 = arith.addf %12, %20 : vector<1x256xf32>
    %cst_15 = arith.constant 1.600000e+01 : f32
    %22 = vector.broadcast %cst_15 : f32 to vector<1x256xf32>
    %23 = arith.mulf %21, %22 : vector<1x256xf32>
    %cst_16 = arith.constant 1.000000e+00 : f32
    %24 = vector.broadcast %cst_16 : f32 to vector<1x256xf32>
    %25 = arith.subf %23, %24 : vector<1x256xf32>
    %cst_17 = arith.constant 5.000000e-01 : f32
    %26 = vector.broadcast %cst_17 : f32 to vector<1x256xf32>
    %27 = arith.mulf %25, %26 : vector<1x256xf32>
    %cst_18 = arith.constant 1.000000e+00 : f32
    %28 = vector.broadcast %cst_18 : f32 to vector<1x256xf32>
    %29 = arith.addf %19, %28 : vector<1x256xf32>
    %cst_19 = arith.constant 1.600000e+01 : f32
    %30 = vector.broadcast %cst_19 : f32 to vector<1x256xf32>
    %31 = arith.mulf %29, %30 : vector<1x256xf32>
    %cst_20 = arith.constant 1.000000e+00 : f32
    %32 = vector.broadcast %cst_20 : f32 to vector<1x256xf32>
    %33 = arith.subf %31, %32 : vector<1x256xf32>
    %cst_21 = arith.constant 5.000000e-01 : f32
    %34 = vector.broadcast %cst_21 : f32 to vector<1x256xf32>
    %35 = arith.mulf %33, %34 : vector<1x256xf32>
    %36 = math.floor %27 : vector<1x256xf32>
    %37 = math.floor %35 : vector<1x256xf32>
    %38 = arith.subf %27, %36 : vector<1x256xf32>
    %cst_22 = arith.constant 1.000000e+00 : f32
    %39 = vector.broadcast %cst_22 : f32 to vector<1x256xf32>
    %40 = arith.subf %39, %38 : vector<1x256xf32>
    %41 = arith.subf %35, %37 : vector<1x256xf32>
    %cst_23 = arith.constant 1.000000e+00 : f32
    %42 = vector.broadcast %cst_23 : f32 to vector<1x256xf32>
    %43 = arith.subf %42, %41 : vector<1x256xf32>
    %44 = arith.fptosi %36 : vector<1x256xf32> to vector<1x256xi32>
    %45 = arith.fptosi %37 : vector<1x256xf32> to vector<1x256xi32>
    %c1_i32 = arith.constant 1 : i32
    %46 = vector.broadcast %c1_i32 : i32 to vector<1x256xi32>
    %47 = arith.addi %44, %46 : vector<1x256xi32>
    %c1_i32_24 = arith.constant 1 : i32
    %48 = vector.broadcast %c1_i32_24 : i32 to vector<1x256xi32>
    %49 = arith.addi %45, %48 : vector<1x256xi32>
    %c0_i32 = arith.constant 0 : i32
    %50 = vector.broadcast %c0_i32 : i32 to vector<1x256xi32>
    %51 = arith.cmpi sge, %44, %50 : vector<1x256xi32>
    %c16_i32 = arith.constant 16 : i32
    %52 = vector.broadcast %c16_i32 : i32 to vector<1x256xi32>
    %53 = arith.cmpi slt, %44, %52 : vector<1x256xi32>
    %54 = arith.andi %51, %53 : vector<1x256xi1>
    %c0_i32_25 = arith.constant 0 : i32
    %55 = vector.broadcast %c0_i32_25 : i32 to vector<1x256xi32>
    %56 = arith.cmpi sge, %47, %55 : vector<1x256xi32>
    %c16_i32_26 = arith.constant 16 : i32
    %57 = vector.broadcast %c16_i32_26 : i32 to vector<1x256xi32>
    %58 = arith.cmpi slt, %47, %57 : vector<1x256xi32>
    %59 = arith.andi %56, %58 : vector<1x256xi1>
    %c0_i32_27 = arith.constant 0 : i32
    %60 = vector.broadcast %c0_i32_27 : i32 to vector<1x256xi32>
    %61 = arith.cmpi sge, %45, %60 : vector<1x256xi32>
    %c16_i32_28 = arith.constant 16 : i32
    %62 = vector.broadcast %c16_i32_28 : i32 to vector<1x256xi32>
    %63 = arith.cmpi slt, %45, %62 : vector<1x256xi32>
    %64 = arith.andi %61, %63 : vector<1x256xi1>
    %c0_i32_29 = arith.constant 0 : i32
    %65 = vector.broadcast %c0_i32_29 : i32 to vector<1x256xi32>
    %66 = arith.cmpi sge, %49, %65 : vector<1x256xi32>
    %c16_i32_30 = arith.constant 16 : i32
    %67 = vector.broadcast %c16_i32_30 : i32 to vector<1x256xi32>
    %68 = arith.cmpi slt, %49, %67 : vector<1x256xi32>
    %69 = arith.andi %66, %68 : vector<1x256xi1>
    %70 = arith.andi %64, %54 : vector<1x256xi1>
    %71 = arith.mulf %43, %40 : vector<1x256xf32>
    %cst_31 = arith.constant 0.000000e+00 : f32
    %72 = vector.broadcast %cst_31 : f32 to vector<1x256xf32>
    %73 = arith.select %70, %71, %72 : vector<1x256xi1>, vector<1x256xf32>
    %74 = arith.andi %64, %59 : vector<1x256xi1>
    %75 = arith.mulf %43, %38 : vector<1x256xf32>
    %cst_32 = arith.constant 0.000000e+00 : f32
    %76 = vector.broadcast %cst_32 : f32 to vector<1x256xf32>
    %77 = arith.select %74, %75, %76 : vector<1x256xi1>, vector<1x256xf32>
    %78 = arith.andi %69, %54 : vector<1x256xi1>
    %79 = arith.mulf %41, %40 : vector<1x256xf32>
    %cst_33 = arith.constant 0.000000e+00 : f32
    %80 = vector.broadcast %cst_33 : f32 to vector<1x256xf32>
    %81 = arith.select %78, %79, %80 : vector<1x256xi1>, vector<1x256xf32>
    %82 = arith.andi %69, %59 : vector<1x256xi1>
    %83 = arith.mulf %41, %38 : vector<1x256xf32>
    %cst_34 = arith.constant 0.000000e+00 : f32
    %84 = vector.broadcast %cst_34 : f32 to vector<1x256xf32>
    %85 = arith.select %82, %83, %84 : vector<1x256xi1>, vector<1x256xf32>
    %86 = arith.addf %73, %77 : vector<1x256xf32>
    %87 = arith.addf %86, %81 : vector<1x256xf32>
    %88 = arith.addf %87, %85 : vector<1x256xf32>
    %c0_35 = arith.constant 0 : index
    %c0_36 = arith.constant 0 : index
    %c0_37 = arith.constant 0 : index
    %89 = vector.load %arg6[%c0_35, %c0_36, %c0_37] : memref<1x4x256xf32, #tpu.memory_space<vmem>>, vector<1x4x256xf32>
    %90 = vector.shape_cast %89 : vector<1x4x256xf32> to vector<4x256xf32>
    %91 = vector.broadcast %88 : vector<1x256xf32> to vector<4x256xf32>
    %92 = arith.mulf %90, %91 : vector<4x256xf32>
    %c0_38 = arith.constant 0 : index
    %c0_39 = arith.constant 0 : index
    %c0_40 = arith.constant 0 : index
    %93 = vector.load %arg8[%c0_38, %c0_39, %c0_40] : memref<1x4x256xf32, #tpu.memory_space<vmem>>, vector<1x4x256xf32>
    %94 = vector.shape_cast %93 : vector<1x4x256xf32> to vector<4x256xf32>
    %95 = vector.shape_cast %92 : vector<4x256xf32> to vector<1x4x256xf32>
    tpu.vector_store %arg8[%c0_38, %c0_39, %c0_40], %95 {strides = array<i32>} : memref<1x4x256xf32, #tpu.memory_space<vmem>>, vector<1x4x256xf32>,
    %c16_i32_41 = arith.constant 16 : i32
    %96 = vector.broadcast %c16_i32_41 : i32 to vector<1x256xi32>
    %97 = arith.muli %45, %96 : vector<1x256xi32>
    %98 = arith.addi %97, %44 : vector<1x256xi32>
    %99 = tpu.iota {dimensions = array<i32: 0>} : vector<256x256xi32>
    %100 = vector.broadcast %98 : vector<1x256xi32> to vector<256x256xi32>
    %101 = arith.subi %99, %100 : vector<256x256xi32>
    %c0_i32_42 = arith.constant 0 : i32
    %102 = vector.broadcast %c0_i32_42 : i32 to vector<256x256xi32>
    %103 = arith.cmpi eq, %101, %102 : vector<256x256xi32>
    %cst_43 = arith.constant 0.000000e+00 : f32
    %104 = vector.shape_cast %73 : vector<1x256xf32> to vector<1x256xf32>
    %105 = vector.broadcast %104 : vector<1x256xf32> to vector<256x256xf32>
    %106 = vector.broadcast %cst_43 : f32 to vector<256x256xf32>
    %107 = arith.select %103, %105, %106 : vector<256x256xi1>, vector<256x256xf32>
    %c1_i32_44 = arith.constant 1 : i32
    %108 = vector.broadcast %c1_i32_44 : i32 to vector<256x256xi32>
    %109 = arith.cmpi eq, %101, %108 : vector<256x256xi32>
    %cst_45 = arith.constant 0.000000e+00 : f32
    %110 = vector.shape_cast %77 : vector<1x256xf32> to vector<1x256xf32>
    %111 = vector.broadcast %110 : vector<1x256xf32> to vector<256x256xf32>
    %112 = vector.broadcast %cst_45 : f32 to vector<256x256xf32>
    %113 = arith.select %109, %111, %112 : vector<256x256xi1>, vector<256x256xf32>
    %114 = arith.addf %107, %113 : vector<256x256xf32>
    %c16_i32_46 = arith.constant 16 : i32
    %115 = vector.broadcast %c16_i32_46 : i32 to vector<256x256xi32>
    %116 = arith.cmpi eq, %101, %115 : vector<256x256xi32>
    %cst_47 = arith.constant 0.000000e+00 : f32
    %117 = vector.shape_cast %81 : vector<1x256xf32> to vector<1x256xf32>
    %118 = vector.broadcast %117 : vector<1x256xf32> to vector<256x256xf32>
    %119 = vector.broadcast %cst_47 : f32 to vector<256x256xf32>
    %120 = arith.select %116, %118, %119 : vector<256x256xi1>, vector<256x256xf32>
    %121 = arith.addf %114, %120 : vector<256x256xf32>
    %c17_i32 = arith.constant 17 : i32
    %122 = vector.broadcast %c17_i32 : i32 to vector<256x256xi32>
    %123 = arith.cmpi eq, %101, %122 : vector<256x256xi32>
    %cst_48 = arith.constant 0.000000e+00 : f32
    %124 = vector.shape_cast %85 : vector<1x256xf32> to vector<1x256xf32>
    %125 = vector.broadcast %124 : vector<1x256xf32> to vector<256x256xf32>
    %126 = vector.broadcast %cst_48 : f32 to vector<256x256xf32>
    %127 = arith.select %123, %125, %126 : vector<256x256xi1>, vector<256x256xf32>
    %128 = arith.addf %121, %127 : vector<256x256xf32>
    %c0_49 = arith.constant 0 : index
    %c0_50 = arith.constant 0 : index
    %c0_51 = arith.constant 0 : index
    %129 = vector.load %arg7[%c0_49, %c0_50, %c0_51] : memref<1x4x256xf32, #tpu.memory_space<vmem>>, vector<1x4x256xf32>
    %130 = vector.shape_cast %129 : vector<1x4x256xf32> to vector<4x256xf32>
    %cst_52 = arith.constant dense<0.000000e+00> : vector<4x256xf32>
    %131 = tpu.matmul %130, %128, %cst_52 {dimension_numbers = #tpu.dot_dimension_numbers<[1], [0], [0], [1], [0, 0, 1, 1], [], []>} : vector<4x256xf32>, vector<256x256xf32>, vector<4x256xf32> -> vector<4x256xf32>
    %132 = vector.broadcast %88 : vector<1x256xf32> to vector<4x256xf32>
    %133 = arith.mulf %131, %132 : vector<4x256xf32>
    %c0_53 = arith.constant 0 : index
    %c0_54 = arith.constant 0 : index
    %c0_55 = arith.constant 0 : index
    %134 = vector.load %arg9[%c0_53, %c0_54, %c0_55] : memref<1x4x256xf32, #tpu.memory_space<vmem>>, vector<1x4x256xf32>
    %135 = vector.shape_cast %134 : vector<1x4x256xf32> to vector<4x256xf32>
    %136 = vector.shape_cast %133 : vector<4x256xf32> to vector<1x4x256xf32>
    tpu.vector_store %arg9[%c0_53, %c0_54, %c0_55], %136 {strides = array<i32>} : memref<1x4x256xf32, #tpu.memory_space<vmem>>, vector<1x4x256xf32>,
    return
  }
  func.func @transform_0(%arg0: i32, %arg1: i32) -> (i32, i32) {
    %c0_i32 = arith.constant 0 : i32
    %c0_i32_0 = arith.constant 0 : i32
    return %c0_i32, %arg1 : i32, i32
  }
  func.func @transform_1(%arg0: i32, %arg1: i32) -> (i32, i32) {
    %c0_i32 = arith.constant 0 : i32
    %c0_i32_0 = arith.constant 0 : i32
    return %c0_i32, %arg1 : i32, i32
  }
  func.func @transform_2(%arg0: i32, %arg1: i32) -> (i32, i32, i32) {
    %c0_i32 = arith.constant 0 : i32
    %c0_i32_0 = arith.constant 0 : i32
    return %arg0, %c0_i32, %arg1 : i32, i32, i32
  }
  func.func @transform_3(%arg0: i32, %arg1: i32) -> (i32, i32, i32) {
    %c0_i32 = arith.constant 0 : i32
    %c0_i32_0 = arith.constant 0 : i32
    return %arg0, %c0_i32, %arg1 : i32, i32, i32
  }
  func.func @transform_4(%arg0: i32, %arg1: i32) -> (i32, i32, i32) {
    %c0_i32 = arith.constant 0 : i32
    %c0_i32_0 = arith.constant 0 : i32
    return %arg0, %c0_i32, %arg1 : i32, i32, i32
  }
  func.func @transform_5(%arg0: i32, %arg1: i32) -> (i32, i32, i32) {
    %c0_i32 = arith.constant 0 : i32
    %c0_i32_0 = arith.constant 0 : i32
    %c0_i32_1 = arith.constant 0 : i32
    return %arg0, %c0_i32, %c0_i32_0 : i32, i32, i32
  }
  func.func @transform_6(%arg0: i32, %arg1: i32) -> (i32, i32, i32) {
    %c0_i32 = arith.constant 0 : i32
    %c0_i32_0 = arith.constant 0 : i32
    return %arg0, %c0_i32, %arg1 : i32, i32, i32
  }
  func.func @transform_7(%arg0: i32, %arg1: i32) -> (i32, i32, i32) {
    %c0_i32 = arith.constant 0 : i32
    %c0_i32_0 = arith.constant 0 : i32
    return %arg0, %c0_i32, %arg1 : i32, i32, i32
  }
}

</mosaic_0001>

<llo_original>
// kernel: tpu_custom_call.1
$region0: #{tpu_custom_call.1}
  #allocation0 [shape = 'u32[]', space=smem, size = 0x4, offset = 0x4, fixed_abs, tag = 'smem constant byte address 0x4 - core index']
  #allocation1 [shape = 'u32[144,128]{1,0:T(1,128)}', space=vmem, size = 0x12000, scoped, tag = 'internal scratch']
  %s0 = inlined_call_operand.hbm [shape: f32[1,256], index: 0, kind: input, shape index: {}]
  %s1 = inlined_call_operand.vmem [shape: f32[1,256], index: 1, kind: input, shape index: {}]
  %s2 = inlined_call_operand.hbm [shape: f32[2,1,256], index: 2, kind: input, shape index: {}]
  %s3 = inlined_call_operand.hbm [shape: f32[2,1,256], index: 3, kind: input, shape index: {}]
  %s4 = inlined_call_operand.hbm [shape: f32[2,4,256], index: 4, kind: input, shape index: {}]
  %s5 = inlined_call_operand.vmem [shape: f32[2,4,256], index: 5, kind: input, shape index: {}]
  %s6 = inlined_call_operand.hbm [shape: f32[2,4,256], index: 6, kind: output, shape index: {0}]
  %s7 = inlined_call_operand.hbm [shape: f32[2,4,256], index: 7, kind: output, shape index: {1}]
  %8 = xla_tuple %s6, %s7
  %s9 = sld [smem:[#allocation0]]
  $region81: #{tpu_custom_call.1} parent=0
    _
  %s11 = ssub.s32 1, %s9
  %s12 = scalar_select 0, %s11, %s9
  $region1: #{tpu_custom_call.1} parent=0
    #allocation2 [shape = 'u8[1024]{0}', space=vmem, size = 0x400, scoped, tag = 'input window, operand 0, single buffered']
    #allocation3 [shape = 's32[2]{0}', space=sflag, size = 0x8, scoped, tag = 'scoped memory for tpu_custom_call.1']
    #allocation4 [shape = 's32[2]{0}', space=sflag, size = 0x8, scoped, tag = 'scoped memory for tpu_custom_call.1']
    #allocation5 [shape = 'u8[2048]{0}', space=vmem, size = 0x800, scoped, tag = 'input window, operand 2']
    #allocation6 [shape = 's32[2]{0}', space=sflag, size = 0x8, scoped, tag = 'scoped memory for tpu_custom_call.1']
    #allocation7 [shape = 'u8[2048]{0}', space=vmem, size = 0x800, scoped, tag = 'input window, operand 3']
    #allocation8 [shape = 'u8[8192]{0}', space=vmem, size = 0x2000, scoped, tag = 'input window, operand 4']
    #allocation9 [shape = 's32[2]{0}', space=sflag, size = 0x8, scoped, tag = 'scoped memory for tpu_custom_call.1']
    #allocation10 [shape = 'u8[8192]{0}', space=vmem, size = 0x2000, scoped, tag = 'output window, operand 0']
    #allocation11 [shape = 'u8[8192]{0}', space=vmem, size = 0x2000, scoped, tag = 'output window, operand 1']
    #allocation12 [shape = 's32[2]{0}', space=sflag, size = 0x8, scoped, tag = 'scoped memory for tpu_custom_call.1']
    %13 = vsyncpa [#allocation3], 0
    %14 = vsyncpa [#allocation6], 0
    %s15 = scalar_lea.sflag [#allocation6], 1
    %16 = vsyncpa %s15, 0
    %17 = vsyncpa [#allocation9], 0
    %s18 = scalar_lea.sflag [#allocation9], 1
    %19 = vsyncpa %s18, 0
    %20 = vsyncpa [#allocation4], 0
    %s21 = scalar_lea.sflag [#allocation4], 1
    %22 = vsyncpa %s21, 0
    %23 = vsyncpa [#allocation12], 0
    %s24 = scalar_lea.sflag [#allocation12], 1
    %25 = vsyncpa %s24, 0
    loop: start=0, step=1, limit=4
    $region2: #{tpu_custom_call.1} parent=1 // loop_pre_header
      _
    $region3: #{tpu_custom_call.1} parent=1 // loop_header
      %s27 = sphi 0, %s31
      %p28 = scmp.ge.s32.totalorder %s27, 4
      %s34 = sphi 0, %s46
      %s35 = sphi 0, %s42
      %s36 = sphi 0, %s34
      %s37 = sphi 0, %s35
      %s38 = sphi 0, %s36
      %s39 = sphi 0, %s37
      %s49 = sphi 0, %s51
      %s52 = sphi 0, %s49
      %s53 = sphi 0, %s52
      %s69 = sphi 0, %s53
      %s75 = sphi 0, %s77
      %s78 = sphi 0, %s75
      %s79 = sphi 0, %s78
      %s95 = sphi 0, %s79
      %s103 = sphi 0, %s105
      %s106 = sphi 0, %s103
      %s107 = sphi 0, %s106
      %s123 = sphi 0, %s107
      %s131 = sphi 0, %s133
      %s134 = sphi 0, %s131
      %s135 = sphi 0, %s134
      %s151 = sphi 0, %s135
      %s159 = sphi 0, %s161
      %s162 = sphi 0, %s159
      %s163 = sphi 0, %s162
      %s179 = sphi 0, %s163
      %s185 = sphi 0, %s187
      %s188 = sphi 0, %s185
      %s189 = sphi 0, %s188
      %s205 = sphi 0, %s189
      %s213 = sphi 0, %s215
      %s216 = sphi 0, %s213
      %s217 = sphi 0, %s216
      %s233 = sphi 0, %s217
      %s241 = sphi 0, %s243
      %s244 = sphi 0, %s241
      %s245 = sphi 0, %s244
      %s261 = sphi 0, %s245
    $region4: #{tpu_custom_call.1} parent=1 // loop_header_branch
      %30 = sbr.rel (%p28) target = $region8
    $region5: #{tpu_custom_call.1} parent=1 // loop_body
      %s32 = ssub.s32 %s27, 1
      %s33 = ssub.s32 %s27, 2
      %s40 = sadd.s32 1, %s35
      %p41 = scmp.ge.s32.totalorder %s40, 1
      %s42 = scalar_select %p41, 0, %s40
      %s43 = sadd.s32 1, %s34
      %s44 = scalar_select %p41, %s43, %s34
      %p45 = scmp.ge.s32.totalorder %s44, 2
      %s46 = scalar_select %p45, 0, %s44
      %s47 = ssub.s32 %s35, %s42
      %p48 = scmp.eq.s32.totalorder %s47, 0
      %s50 = sadd.s32 %s49, 1
      %s51 = scalar_select %p48, %s49, %s50
      %p54 = pneg %p48
      %p55 = scmp.eq.s32.totalorder %s27, 1
      %p56 = por %p54, %p55
      %p57 = scmp.ne.s32.totalorder %s49, %s52
      %p58 = scmp.eq.s32.totalorder %s27, 0
      %p59 = por %p57, %p58
      %p60 = scmp.ne.s32.totalorder %s49, %s52
      %p61 = scmp.eq.s32.totalorder %s32, 1
      %p62 = por %p60, %p61
      %p63 = scmp.ne.s32.totalorder %s52, %s53
      %p64 = scmp.eq.s32.totalorder %s32, 0
      %p65 = por %p63, %p64
      %p66 = scmp.ne.s32.totalorder %s52, %s53
      %p67 = scmp.eq.s32.totalorder %s33, 1
      %p68 = por %p66, %p67
      %p70 = scmp.ne.s32.totalorder %s53, %s69
      %p71 = scmp.eq.s32.totalorder %s33, 0
      %p72 = por %p70, %p71
      %s73 = ssub.s32 %s35, %s42
      %p74 = scmp.eq.s32.totalorder %s73, 0
      %s76 = sadd.s32 %s75, 1
      %s77 = scalar_select %p74, %s75, %s76
      %p80 = pneg %p74
      %p81 = scmp.eq.s32.totalorder %s27, 1
      %p82 = por %p80, %p81
      %p83 = scmp.ne.s32.totalorder %s75, %s78
      %p84 = scmp.eq.s32.totalorder %s27, 0
      %p85 = por %p83, %p84
      %p86 = scmp.ne.s32.totalorder %s75, %s78
      %p87 = scmp.eq.s32.totalorder %s32, 1
      %p88 = por %p86, %p87
      %p89 = scmp.ne.s32.totalorder %s78, %s79
      %p90 = scmp.eq.s32.totalorder %s32, 0
      %p91 = por %p89, %p90
      %p92 = scmp.ne.s32.totalorder %s78, %s79
      %p93 = scmp.eq.s32.totalorder %s33, 1
      %p94 = por %p92, %p93
      %p96 = scmp.ne.s32.totalorder %s79, %s95
      %p97 = scmp.eq.s32.totalorder %s33, 0
      %p98 = por %p96, %p97
      %s99 = ssub.s32 %s34, %s46
      %s100 = ssub.s32 %s35, %s42
      %s101 = sor.u32 %s99, %s100
      %p102 = scmp.eq.s32.totalorder %s101, 0
      %s104 = sadd.s32 %s103, 1
      %s105 = scalar_select %p102, %s103, %s104
      %p108 = pneg %p102
      %p109 = scmp.eq.s32.totalorder %s27, 1
      %p110 = por %p108, %p109
      %p111 = scmp.ne.s32.totalorder %s103, %s106
      %p112 = scmp.eq.s32.totalorder %s27, 0
      %p113 = por %p111, %p112
      %p114 = scmp.ne.s32.totalorder %s103, %s106
      %p115 = scmp.eq.s32.totalorder %s32, 1
      %p116 = por %p114, %p115
      %p117 = scmp.ne.s32.totalorder %s106, %s107
      %p118 = scmp.eq.s32.totalorder %s32, 0
      %p119 = por %p117, %p118
      %p120 = scmp.ne.s32.totalorder %s106, %s107
      %p121 = scmp.eq.s32.totalorder %s33, 1
      %p122 = por %p120, %p121
      %p124 = scmp.ne.s32.totalorder %s107, %s123
      %p125 = scmp.eq.s32.totalorder %s33, 0
      %p126 = por %p124, %p125
      %s127 = ssub.s32 %s34, %s46
      %s128 = ssub.s32 %s35, %s42
      %s129 = sor.u32 %s127, %s128
      %p130 = scmp.eq.s32.totalorder %s129, 0
      %s132 = sadd.s32 %s131, 1
      %s133 = scalar_select %p130, %s131, %s132
      %p136 = pneg %p130
      %p137 = scmp.eq.s32.totalorder %s27, 1
      %p138 = por %p136, %p137
      %p139 = scmp.ne.s32.totalorder %s131, %s134
      %p140 = scmp.eq.s32.totalorder %s27, 0
      %p141 = por %p139, %p140
      %p142 = scmp.ne.s32.totalorder %s131, %s134
      %p143 = scmp.eq.s32.totalorder %s32, 1
      %p144 = por %p142, %p143
      %p145 = scmp.ne.s32.totalorder %s134, %s135
      %p146 = scmp.eq.s32.totalorder %s32, 0
      %p147 = por %p145, %p146
      %p148 = scmp.ne.s32.totalorder %s134, %s135
      %p149 = scmp.eq.s32.totalorder %s33, 1
      %p150 = por %p148, %p149
      %p152 = scmp.ne.s32.totalorder %s135, %s151
      %p153 = scmp.eq.s32.totalorder %s33, 0
      %p154 = por %p152, %p153
      %s155 = ssub.s32 %s34, %s46
      %s156 = ssub.s32 %s35, %s42
      %s157 = sor.u32 %s155, %s156
      %p158 = scmp.eq.s32.totalorder %s157, 0
      %s160 = sadd.s32 %s159, 1
      %s161 = scalar_select %p158, %s159, %s160
      %p164 = pneg %p158
      %p165 = scmp.eq.s32.totalorder %s27, 1
      %p166 = por %p164, %p165
      %p167 = scmp.ne.s32.totalorder %s159, %s162
      %p168 = scmp.eq.s32.totalorder %s27, 0
      %p169 = por %p167, %p168
      %p170 = scmp.ne.s32.totalorder %s159, %s162
      %p171 = scmp.eq.s32.totalorder %s32, 1
      %p172 = por %p170, %p171
      %p173 = scmp.ne.s32.totalorder %s162, %s163
      %p174 = scmp.eq.s32.totalorder %s32, 0
      %p175 = por %p173, %p174
      %p176 = scmp.ne.s32.totalorder %s162, %s163
      %p177 = scmp.eq.s32.totalorder %s33, 1
      %p178 = por %p176, %p177
      %p180 = scmp.ne.s32.totalorder %s163, %s179
      %p181 = scmp.eq.s32.totalorder %s33, 0
      %p182 = por %p180, %p181
      %s183 = ssub.s32 %s34, %s46
      %p184 = scmp.eq.s32.totalorder %s183, 0
      %s186 = sadd.s32 %s185, 1
      %s187 = scalar_select %p184, %s185, %s186
      %p190 = pneg %p184
      %p191 = scmp.eq.s32.totalorder %s27, 1
      %p192 = por %p190, %p191
      %p193 = scmp.ne.s32.totalorder %s185, %s188
      %p194 = scmp.eq.s32.totalorder %s27, 0
      %p195 = por %p193, %p194
      %p196 = scmp.ne.s32.totalorder %s185, %s188
      %p197 = scmp.eq.s32.totalorder %s32, 1
      %p198 = por %p196, %p197
      %p199 = scmp.ne.s32.totalorder %s188, %s189
      %p200 = scmp.eq.s32.totalorder %s32, 0
      %p201 = por %p199, %p200
      %p202 = scmp.ne.s32.totalorder %s188, %s189
      %p203 = scmp.eq.s32.totalorder %s33, 1
      %p204 = por %p202, %p203
      %p206 = scmp.ne.s32.totalorder %s189, %s205
      %p207 = scmp.eq.s32.totalorder %s33, 0
      %p208 = por %p206, %p207
      %s209 = ssub.s32 %s34, %s46
      %s210 = ssub.s32 %s35, %s42
      %s211 = sor.u32 %s209, %s210
      %p212 = scmp.eq.s32.totalorder %s211, 0
      %s214 = sadd.s32 %s213, 1
      %s215 = scalar_select %p212, %s213, %s214
      %p218 = pneg %p212
      %p219 = scmp.eq.s32.totalorder %s27, 1
      %p220 = por %p218, %p219
      %p221 = scmp.ne.s32.totalorder %s213, %s216
      %p222 = scmp.eq.s32.totalorder %s27, 0
      %p223 = por %p221, %p222
      %p224 = scmp.ne.s32.totalorder %s213, %s216
      %p225 = scmp.eq.s32.totalorder %s32, 1
      %p226 = por %p224, %p225
      %p227 = scmp.ne.s32.totalorder %s216, %s217
      %p228 = scmp.eq.s32.totalorder %s32, 0
      %p229 = por %p227, %p228
      %p230 = scmp.ne.s32.totalorder %s216, %s217
      %p231 = scmp.eq.s32.totalorder %s33, 1
      %p232 = por %p230, %p231
      %p234 = scmp.ne.s32.totalorder %s217, %s233
      %p235 = scmp.eq.s32.totalorder %s33, 0
      %p236 = por %p234, %p235
      %s237 = ssub.s32 %s34, %s46
      %s238 = ssub.s32 %s35, %s42
      %s239 = sor.u32 %s237, %s238
      %p240 = scmp.eq.s32.totalorder %s239, 0
      %s242 = sadd.s32 %s241, 1
      %s243 = scalar_select %p240, %s241, %s242
      %p246 = pneg %p240
      %p247 = scmp.eq.s32.totalorder %s27, 1
      %p248 = por %p246, %p247
      %p249 = scmp.ne.s32.totalorder %s241, %s244
      %p250 = scmp.eq.s32.totalorder %s27, 0
      %p251 = por %p249, %p250
      %p252 = scmp.ne.s32.totalorder %s241, %s244
      %p253 = scmp.eq.s32.totalorder %s32, 1
      %p254 = por %p252, %p253
      %p255 = scmp.ne.s32.totalorder %s244, %s245
      %p256 = scmp.eq.s32.totalorder %s32, 0
      %p257 = por %p255, %p256
      %p258 = scmp.ne.s32.totalorder %s244, %s245
      %p259 = scmp.eq.s32.totalorder %s33, 1
      %p260 = por %p258, %p259
      %p262 = scmp.ne.s32.totalorder %s245, %s261
      %p263 = scmp.eq.s32.totalorder %s33, 0
      %p264 = por %p262, %p263
      %p265 = scmp.le.s32.totalorder 1, %s27
      %p266 = scmp.lt.s32.totalorder %s27, 3
      %p267 = pnand %p265, %p266
      %p268 = pneg %p267
      // Predicated region
      $region9: #{tpu_custom_call.1} parent=5 // pred_check
        _
      $region10: #{tpu_custom_call.1} parent=5 // pred_check_branch
        %270 = sbr.rel (%p267) target = $region12
      $region11: #{tpu_custom_call.1} parent=5 // pred_region
        %s271 = ssub.s32 %s27, 1
        // Predicated region
        $region13: #{tpu_custom_call.1} parent=11 // pred_check
          %p272 = pneg %p65
        $region14: #{tpu_custom_call.1} parent=11 // pred_check_branch
          %274 = sbr.rel (%p272) target = $region16
        $region15: #{tpu_custom_call.1} parent=11 // pred_region
          %s275 = smul.u32 2, %s37
          %s277 = ssub.s32 32, 32
          %278 = vsyncadd [#allocation3], %s277
          %s279 = smul.addr %s275, 16
          %s280 = scalar_lea.hbm %s0, %s279
          %s282 = sshll.u32 [#allocation2], 4
          %s283 = int_to_ptr.vmem [resolvable:$true] %s282
          %285 = dma.hbm_to_vmem [thread:$0]  %s280, 32, %s283, [#allocation3]
        $region16: #{tpu_custom_call.1} parent=11 // pred_fallthru
          _
        // Predicated region
        $region17: #{tpu_custom_call.1} parent=11 // pred_check
          %p286 = pneg %p91
        $region18: #{tpu_custom_call.1} parent=11 // pred_check_branch
          %288 = sbr.rel (%p286) target = $region20
        $region19: #{tpu_custom_call.1} parent=11 // pred_region
          %s289 = smul.u32 2, %s37
          %p290 = scmp.lt.s32.totalorder %s289, 1
          %s291 = scalar_select %p290, %s289, 1
          %s292 = scalar_lea.vmem %s1, %s291
          %s293 = smul.u32 2, %s37
        $region20: #{tpu_custom_call.1} parent=11 // pred_fallthru
          _
      $region12: #{tpu_custom_call.1} parent=5 // pred_fallthru
        _
      %p294 = scmp.lt.s32.totalorder %s27, 2
      // Predicated region
      $region21: #{tpu_custom_call.1} parent=5 // pred_check
        %p295 = pneg %p294
      $region22: #{tpu_custom_call.1} parent=5 // pred_check_branch
        %297 = sbr.rel (%p295) target = $region24
      $region23: #{tpu_custom_call.1} parent=5 // pred_region
        // Predicated region
        $region25: #{tpu_custom_call.1} parent=23 // pred_check
          %p298 = pneg %p113
        $region26: #{tpu_custom_call.1} parent=23 // pred_check_branch
          %300 = sbr.rel (%p298) target = $region28
        $region27: #{tpu_custom_call.1} parent=23 // pred_region
          %s301 = sand.u32 %s27, 1
          %s302 = scalar_lea.sflag [#allocation6], %s301
          %s303 = sand.u32 %s103, 1
          %s304 = smul.addr %s303, 2
          %s305 = scalar_lea.vmem [#allocation5], %s304
          %s306 = smul.u32 2, %s35
          %s308 = ssub.s32 32, 32
          %309 = vsyncadd %s302, %s308
          %s310 = smul.addr %s34, 2
          %s311 = sadd.s32 %s306, %s310
          %s312 = smul.addr %s311, 16
          %s313 = scalar_lea.hbm %s2, %s312
          %s315 = sshll.u32 %s305, 4
          %s316 = int_to_ptr.vmem [resolvable:$true] %s315
          %318 = dma.hbm_to_vmem [thread:$0]  %s313, 32, %s316, %s302
        $region28: #{tpu_custom_call.1} parent=23 // pred_fallthru
          _
        // Predicated region
        $region29: #{tpu_custom_call.1} parent=23 // pred_check
          %p319 = pneg %p141
        $region30: #{tpu_custom_call.1} parent=23 // pred_check_branch
          %321 = sbr.rel (%p319) target = $region32
        $region31: #{tpu_custom_call.1} parent=23 // pred_region
          %s322 = sand.u32 %s27, 1
          %s323 = scalar_lea.sflag [#allocation6], %s322
          %s324 = sand.u32 %s131, 1
          %s325 = smul.addr %s324, 2
          %s326 = scalar_lea.vmem [#allocation7], %s325
          %s327 = smul.u32 2, %s35
          %s329 = ssub.s32 32, 32
          %330 = vsyncadd %s323, %s329
          %s331 = smul.addr %s34, 2
          %s332 = sadd.s32 %s327, %s331
          %s333 = smul.addr %s332, 16
          %s334 = scalar_lea.hbm %s3, %s333
          %s336 = sshll.u32 %s326, 4
          %s337 = int_to_ptr.vmem [resolvable:$true] %s336
          %339 = dma.hbm_to_vmem [thread:$0]  %s334, 32, %s337, %s323
        $region32: #{tpu_custom_call.1} parent=23 // pred_fallthru
          _
        // Predicated region
        $region33: #{tpu_custom_call.1} parent=23 // pred_check
          %p340 = pneg %p169
        $region34: #{tpu_custom_call.1} parent=23 // pred_check_branch
          %342 = sbr.rel (%p340) target = $region36
        $region35: #{tpu_custom_call.1} parent=23 // pred_region
          %s343 = sand.u32 %s159, 1
          %s344 = scalar_lea.sflag [#allocation9], %s343
          %s345 = sand.u32 %s159, 1
          %s346 = smul.addr %s345, 8
          %s347 = scalar_lea.vmem [#allocation8], %s346
          %s348 = smul.u32 2, %s35
          %s350 = ssub.s32 128, 128
          %351 = vsyncadd %s344, %s350
          %s352 = smul.addr %s34, 2
          %s353 = sadd.s32 %s348, %s352
          %s354 = smul.addr %s353, 64
          %s355 = scalar_lea.hbm %s4, %s354
          %s357 = sshll.u32 %s347, 4
          %s358 = int_to_ptr.vmem [resolvable:$true] %s357
          %360 = dma.hbm_to_vmem [thread:$0]  %s355, 128, %s358, %s344
        $region36: #{tpu_custom_call.1} parent=23 // pred_fallthru
          _
        // Predicated region
        $region37: #{tpu_custom_call.1} parent=23 // pred_check
          %p361 = pneg %p195
        $region38: #{tpu_custom_call.1} parent=23 // pred_check_branch
          %363 = sbr.rel (%p361) target = $region40
        $region39: #{tpu_custom_call.1} parent=23 // pred_region
          %p364 = scmp.lt.s32.totalorder %s34, 1
          %s365 = scalar_select %p364, %s34, 1
          %s366 = smul.addr %s365, 2
          %s367 = smul.addr %s366, 4
          %s368 = scalar_lea.vmem %s5, %s367
        $region40: #{tpu_custom_call.1} parent=23 // pred_fallthru
          _
      $region24: #{tpu_custom_call.1} parent=5 // pred_fallthru
        _
      %p369 = scmp.le.s32.totalorder 1, %s27
      %p370 = scmp.lt.s32.totalorder %s27, 3
      %p371 = pnand %p369, %p370
      %p372 = pneg %p371
      // Predicated region
      $region41: #{tpu_custom_call.1} parent=5 // pred_check
        _
      $region42: #{tpu_custom_call.1} parent=5 // pred_check_branch
        %374 = sbr.rel (%p371) target = $region44
      $region43: #{tpu_custom_call.1} parent=5 // pred_region
        %s375 = ssub.s32 %s27, 1
        // Predicated region
        $region45: #{tpu_custom_call.1} parent=43 // pred_check
          %p376 = pneg %p65
        $region46: #{tpu_custom_call.1} parent=43 // pred_check_branch
          %378 = sbr.rel (%p376) target = $region48
        $region47: #{tpu_custom_call.1} parent=43 // pred_region
          %379 = dma.done [#allocation3], 32
        $region48: #{tpu_custom_call.1} parent=43 // pred_fallthru
          _
        %s380 = sand.u32 %s32, 1
        %s381 = scalar_lea.sflag [#allocation6], %s380
        %s382 = sand.u32 %s106, 1
        %s383 = smul.addr %s382, 2
        %s384 = scalar_lea.vmem [#allocation5], %s383
        // Predicated region
        $region49: #{tpu_custom_call.1} parent=43 // pred_check
          %p385 = pneg %p119
        $region50: #{tpu_custom_call.1} parent=43 // pred_check_branch
          %387 = sbr.rel (%p385) target = $region52
        $region51: #{tpu_custom_call.1} parent=43 // pred_region
          %388 = dma.done %s381, 32
        $region52: #{tpu_custom_call.1} parent=43 // pred_fallthru
          _
        %s389 = sand.u32 %s32, 1
        %s390 = scalar_lea.sflag [#allocation6], %s389
        %s391 = sand.u32 %s134, 1
        %s392 = smul.addr %s391, 2
        %s393 = scalar_lea.vmem [#allocation7], %s392
        // Predicated region
        $region53: #{tpu_custom_call.1} parent=43 // pred_check
          %p394 = pneg %p147
        $region54: #{tpu_custom_call.1} parent=43 // pred_check_branch
          %396 = sbr.rel (%p394) target = $region56
        $region55: #{tpu_custom_call.1} parent=43 // pred_region
          %397 = dma.done %s390, 32
        $region56: #{tpu_custom_call.1} parent=43 // pred_fallthru
          _
        %s398 = sand.u32 %s162, 1
        %s399 = scalar_lea.sflag [#allocation9], %s398
        %s400 = sand.u32 %s162, 1
        %s401 = smul.addr %s400, 8
        %s402 = scalar_lea.vmem [#allocation8], %s401
        // Predicated region
        $region57: #{tpu_custom_call.1} parent=43 // pred_check
          %p403 = pneg %p175
        $region58: #{tpu_custom_call.1} parent=43 // pred_check_branch
          %405 = sbr.rel (%p403) target = $region60
        $region59: #{tpu_custom_call.1} parent=43 // pred_region
          %406 = dma.done %s399, 128
        $region60: #{tpu_custom_call.1} parent=43 // pred_fallthru
          _
        %p407 = pneg %p65
        %p408 = pneg %p62
        %s409 = smul.u32 2, %s37
        %p410 = scmp.lt.s32.totalorder %s409, 1
        %s411 = scalar_select %p410, %s409, 1
        %s412 = scalar_lea.vmem %s1, %s411
        %p413 = pneg %p91
        %p414 = pneg %p88
        %s415 = sand.u32 %s32, 1
        %s416 = scalar_lea.sflag [#allocation6], %s415
        %s417 = sand.u32 %s106, 1
        %s418 = smul.addr %s417, 2
        %s419 = scalar_lea.vmem [#allocation5], %s418
        %p420 = pneg %p119
        %p421 = pneg %p116
        %s422 = sand.u32 %s32, 1
        %s423 = scalar_lea.sflag [#allocation6], %s422
        %s424 = sand.u32 %s134, 1
        %s425 = smul.addr %s424, 2
        %s426 = scalar_lea.vmem [#allocation7], %s425
        %p427 = pneg %p147
        %p428 = pneg %p144
        %s429 = sand.u32 %s162, 1
        %s430 = scalar_lea.sflag [#allocation9], %s429
        %s431 = sand.u32 %s162, 1
        %s432 = smul.addr %s431, 8
        %s433 = scalar_lea.vmem [#allocation8], %s432
        %p434 = pneg %p175
        %p435 = pneg %p172
        %p436 = scmp.lt.s32.totalorder %s36, 1
        %s437 = scalar_select %p436, %s36, 1
        %s438 = smul.addr %s437, 2
        %s439 = smul.addr %s438, 4
        %s440 = scalar_lea.vmem %s5, %s439
        %p441 = pneg %p201
        %p442 = pneg %p198
        %p443 = pneg %p229
        %p444 = pneg %p226
        %s445 = sand.u32 %s216, 1
        %s446 = scalar_lea.sflag [#allocation4], %s445
        %s447 = sand.u32 %s216, 1
        %s448 = smul.addr %s447, 8
        %s449 = scalar_lea.vmem [#allocation10], %s448
        %p450 = pneg %p257
        %p451 = pneg %p254
        %s452 = sand.u32 %s244, 1
        %s453 = scalar_lea.sflag [#allocation12], %s452
        %s454 = sand.u32 %s244, 1
        %s455 = smul.addr %s454, 8
        %s456 = scalar_lea.vmem [#allocation11], %s455
        %s457 = smul.u32 2, %s37
        %s458 = smul.u32 2, %s37
        %p459 = scmp.lt.s32.totalorder %s458, 1
        %s460 = scalar_select %p459, %s458, 1
        %s461 = scalar_lea.vmem %s1, %s460
        %s462 = smul.u32 2, %s37
        %s463 = smul.u32 2, %s37
        %s464 = smul.u32 2, %s37
        %s465 = smul.u32 2, %s37
        %p466 = scmp.lt.s32.totalorder %s36, 1
        %s467 = scalar_select %p466, %s36, 1
        %s468 = smul.addr %s467, 2
        %s469 = smul.addr %s468, 4
        %s470 = scalar_lea.vmem %s5, %s469
        %s471 = smul.u32 2, %s37
        %s472 = smul.u32 2, %s37
        %v473 = vld [vmem:[#allocation2] sm:$0x3]
        %v474 = vld [vmem:[%s461] sm:$0x3]
        %v475 = vld [vmem:[%s384] sm:$0x3]
        %v476 = vld [vmem:[%s393] sm:$0x3]
        %v477 = vadd.f32 %v473, %v475
        %v478 = vrcp.pop 16.0
        %v479 = vmul.f32 %v477, %v478
        %v480 = vmul.f32 %v479, 2.0
        %v481 = vsub.f32 %v480, 1.0
        %v482 = vadd.f32 %v474, %v476
        %v483 = vmul.f32 %v482, %v478
        %v484 = vmul.f32 %v483, 2.0
        %v485 = vsub.f32 %v484, 1.0
        %v486 = vadd.f32 %v481, 1.0
        %v487 = vmul.f32 %v486, 16.0
        %v488 = vsub.f32 %v487, 1.0
        %v489 = vmul.f32 %v488, 0.5
        %v490 = vadd.f32 %v485, 1.0
        %v491 = vmul.f32 %v490, 16.0
        %v492 = vsub.f32 %v491, 1.0
        %v493 = vmul.f32 %v492, 0.5
        %v494 = vfloor.f32 %v489
        %v495 = vfloor.f32 %v493
        %v496 = vsub.f32 %v489, %v494
        %v497 = vsub.f32 1.0, %v496
        %v498 = vsub.f32 %v493, %v495
        %v499 = vsub.f32 1.0, %v498
        %v500 = vcvt.f32.s32.to.zero.pseudo %v494
        %v501 = vcvt.f32.s32.to.zero.pseudo %v495
        %v502 = vadd.s32 %v500, 1
        %v503 = vadd.s32 %v501, 1
        %vm504 = vcmp.ge.s32.totalorder %v500, 0
        %vm505 = vcmp.lt.s32.totalorder %v500, 16
        %vm506 = vmand %vm504, %vm505
        %vm507 = vcmp.ge.s32.totalorder %v502, 0
        %vm508 = vcmp.lt.s32.totalorder %v502, 16
        %vm509 = vmand %vm507, %vm508
        %vm510 = vcmp.ge.s32.totalorder %v501, 0
        %vm511 = vcmp.lt.s32.totalorder %v501, 16
        %vm512 = vmand %vm510, %vm511
        %vm513 = vcmp.ge.s32.totalorder %v503, 0
        %vm514 = vcmp.lt.s32.totalorder %v503, 16
        %vm515 = vmand %vm513, %vm514
        %vm516 = vmand %vm512, %vm506
        %v517 = vmul.f32 %v499, %v497
        %v518 = vsel %vm516, %v517, 0.0
        %vm519 = vmand %vm512, %vm509
        %v520 = vmul.f32 %v499, %v496
        %v521 = vsel %vm519, %v520, 0.0
        %vm522 = vmand %vm515, %vm506
        %v523 = vmul.f32 %v498, %v497
        %v524 = vsel %vm522, %v523, 0.0
        %vm525 = vmand %vm515, %vm509
        %v526 = vmul.f32 %v498, %v496
        %v527 = vsel %vm525, %v526, 0.0
        %v528 = vadd.f32 %v518, %v521
        %v529 = vadd.f32 %v528, %v524
        %v530 = vadd.f32 %v529, %v527
        %v531 = vld [vmem:[%s402] sm:$0xff]
        %v533 = vlaneseq
        %v534 = vshrl.u32 %v533, 7
        %v535 = vsub.s32 0, %v534
        %v536 = vrot.slane %v530, %v535
        %v537 = vlaneseq
        %v538 = vshrl.u32 %v537, 7
        %v539 = vsub.s32 1, %v538
        %v540 = vrot.slane %v530, %v539
        %v543 = vcombine.low %v536, %v540
        %v545 = vmul.f32 %v531, %v543
        %546 = vst [vmem:[%s449] sm:$0xff] %v545
        %v547 = vmul.u32 %v501, 16
        %v548 = vadd.s32 %v547, %v500
        %v549 = vlaneseq
        %v550 = vshrl.u32 %v549, 7
        %v551 = vadd.s32 %v550, 8
        %v552 = vadd.s32 %v550, 16
        %v553 = vadd.s32 %v550, 24
        %v554 = vadd.s32 %v550, 32
        %v555 = vadd.s32 %v550, 40
        %v556 = vadd.s32 %v550, 48
        %v557 = vadd.s32 %v550, 56
        %v558 = vadd.s32 %v550, 64
        %v559 = vadd.s32 %v550, 72
        %v560 = vadd.s32 %v550, 80
        %v561 = vadd.s32 %v550, 88
        %v562 = vadd.s32 %v550, 96
        %v563 = vadd.s32 %v550, 104
        %v564 = vadd.s32 %v550, 112
        %v565 = vadd.s32 %v550, 120
        %v566 = vadd.s32 %v550, 128
        %v567 = vadd.s32 %v550, 136
        %v568 = vadd.s32 %v550, 144
        %v569 = vadd.s32 %v550, 152
        %v570 = vadd.s32 %v550, 160
        %v571 = vadd.s32 %v550, 168
        %v572 = vadd.s32 %v550, 176
        %v573 = vadd.s32 %v550, 184
        %v574 = vadd.s32 %v550, 192
        %v575 = vadd.s32 %v550, 200
        %v576 = vadd.s32 %v550, 208
        %v577 = vadd.s32 %v550, 216
        %v578 = vadd.s32 %v550, 224
        %v579 = vadd.s32 %v550, 232
        %v580 = vadd.s32 %v550, 240
        %v581 = vadd.s32 %v550, 248
        %v582 = vlaneseq
        %v583 = vshrl.u32 %v582, 7
        %v584 = vsub.s32 0, %v583
        %v585 = vrot.slane %v548, %v584
        %v586 = vlaneseq
        %v587 = vshrl.u32 %v586, 7
        %v588 = vsub.s32 1, %v587
        %v589 = vrot.slane %v548, %v588
        %v590 = vsub.s32 %v550, %v585
        %v591 = vsub.s32 %v550, %v589
        %v592 = vsub.s32 %v551, %v585
        %v593 = vsub.s32 %v551, %v589
        %v594 = vsub.s32 %v552, %v585
        %v595 = vsub.s32 %v552, %v589
        %v596 = vsub.s32 %v553, %v585
        %v597 = vsub.s32 %v553, %v589
        %v598 = vsub.s32 %v554, %v585
        %v599 = vsub.s32 %v554, %v589
        %v600 = vsub.s32 %v555, %v585
        %v601 = vsub.s32 %v555, %v589
        %v602 = vsub.s32 %v556, %v585
        %v603 = vsub.s32 %v556, %v589
        %v604 = vsub.s32 %v557, %v585
        %v605 = vsub.s32 %v557, %v589
        %v606 = vsub.s32 %v558, %v585
        %v607 = vsub.s32 %v558, %v589
        %v608 = vsub.s32 %v559, %v585
        %v609 = vsub.s32 %v559, %v589
        %v610 = vsub.s32 %v560, %v585
        %v611 = vsub.s32 %v560, %v589
        %v612 = vsub.s32 %v561, %v585
        %v613 = vsub.s32 %v561, %v589
        %v614 = vsub.s32 %v562, %v585
        %v615 = vsub.s32 %v562, %v589
        %v616 = vsub.s32 %v563, %v585
        %v617 = vsub.s32 %v563, %v589
        %v618 = vsub.s32 %v564, %v585
        %v619 = vsub.s32 %v564, %v589
        %v620 = vsub.s32 %v565, %v585
        %v621 = vsub.s32 %v565, %v589
        %v622 = vsub.s32 %v566, %v585
        %v623 = vsub.s32 %v566, %v589
        %v624 = vsub.s32 %v567, %v585
        %v625 = vsub.s32 %v567, %v589
        %v626 = vsub.s32 %v568, %v585
        %v627 = vsub.s32 %v568, %v589
        %v628 = vsub.s32 %v569, %v585
        %v629 = vsub.s32 %v569, %v589
        %v630 = vsub.s32 %v570, %v585
        %v631 = vsub.s32 %v570, %v589
        %v632 = vsub.s32 %v571, %v585
        %v633 = vsub.s32 %v571, %v589
        %v634 = vsub.s32 %v572, %v585
        %v635 = vsub.s32 %v572, %v589
        %v636 = vsub.s32 %v573, %v585
        %v637 = vsub.s32 %v573, %v589
        %v638 = vsub.s32 %v574, %v585
        %v639 = vsub.s32 %v574, %v589
        %v640 = vsub.s32 %v575, %v585
        %v641 = vsub.s32 %v575, %v589
        %v642 = vsub.s32 %v576, %v585
        %v643 = vsub.s32 %v576, %v589
        %v644 = vsub.s32 %v577, %v585
        %v645 = vsub.s32 %v577, %v589
        %v646 = vsub.s32 %v578, %v585
        %v647 = vsub.s32 %v578, %v589
        %v648 = vsub.s32 %v579, %v585
        %v649 = vsub.s32 %v579, %v589
        %v650 = vsub.s32 %v580, %v585
        %v651 = vsub.s32 %v580, %v589
        %v652 = vsub.s32 %v581, %v585
        %v653 = vsub.s32 %v581, %v589
        %vm654 = vcmp.eq.s32.totalorder %v590, 0
        %vm655 = vcmp.eq.s32.totalorder %v591, 0
        %vm656 = vcmp.eq.s32.totalorder %v592, 0
        %vm657 = vcmp.eq.s32.totalorder %v593, 0
        %vm658 = vcmp.eq.s32.totalorder %v594, 0
        %vm659 = vcmp.eq.s32.totalorder %v595, 0
        %vm660 = vcmp.eq.s32.totalorder %v596, 0
        %vm661 = vcmp.eq.s32.totalorder %v597, 0
        %vm662 = vcmp.eq.s32.totalorder %v598, 0
        %vm663 = vcmp.eq.s32.totalorder %v599, 0
        %vm664 = vcmp.eq.s32.totalorder %v600, 0
        %vm665 = vcmp.eq.s32.totalorder %v601, 0
        %vm666 = vcmp.eq.s32.totalorder %v602, 0
        %vm667 = vcmp.eq.s32.totalorder %v603, 0
        %vm668 = vcmp.eq.s32.totalorder %v604, 0
        %vm669 = vcmp.eq.s32.totalorder %v605, 0
        %vm670 = vcmp.eq.s32.totalorder %v606, 0
        %vm671 = vcmp.eq.s32.totalorder %v607, 0
        %vm672 = vcmp.eq.s32.totalorder %v608, 0
        %vm673 = vcmp.eq.s32.totalorder %v609, 0
        %vm674 = vcmp.eq.s32.totalorder %v610, 0
        %vm675 = vcmp.eq.s32.totalorder %v611, 0
        %vm676 = vcmp.eq.s32.totalorder %v612, 0
        %vm677 = vcmp.eq.s32.totalorder %v613, 0
        %vm678 = vcmp.eq.s32.totalorder %v614, 0
        %vm679 = vcmp.eq.s32.totalorder %v615, 0
        %vm680 = vcmp.eq.s32.totalorder %v616, 0
        %vm681 = vcmp.eq.s32.totalorder %v617, 0
        %vm682 = vcmp.eq.s32.totalorder %v618, 0
        %vm683 = vcmp.eq.s32.totalorder %v619, 0
        %vm684 = vcmp.eq.s32.totalorder %v620, 0
        %vm685 = vcmp.eq.s32.totalorder %v621, 0
        %vm686 = vcmp.eq.s32.totalorder %v622, 0
        %vm687 = vcmp.eq.s32.totalorder %v623, 0
        %vm688 = vcmp.eq.s32.totalorder %v624, 0
        %vm689 = vcmp.eq.s32.totalorder %v625, 0
        %vm690 = vcmp.eq.s32.totalorder %v626, 0
        %vm691 = vcmp.eq.s32.totalorder %v627, 0
        %vm692 = vcmp.eq.s32.totalorder %v628, 0
        %vm693 = vcmp.eq.s32.totalorder %v629, 0
        %vm694 = vcmp.eq.s32.totalorder %v630, 0
        %vm695 = vcmp.eq.s32.totalorder %v631, 0
        %vm696 = vcmp.eq.s32.totalorder %v632, 0
        %vm697 = vcmp.eq.s32.totalorder %v633, 0
        %vm698 = vcmp.eq.s32.totalorder %v634, 0
        %vm699 = vcmp.eq.s32.totalorder %v635, 0
        %vm700 = vcmp.eq.s32.totalorder %v636, 0
        %vm701 = vcmp.eq.s32.totalorder %v637, 0
        %vm702 = vcmp.eq.s32.totalorder %v638, 0
        %vm703 = vcmp.eq.s32.totalorder %v639, 0
        %vm704 = vcmp.eq.s32.totalorder %v640, 0
        %vm705 = vcmp.eq.s32.totalorder %v641, 0
        %vm706 = vcmp.eq.s32.totalorder %v642, 0
        %vm707 = vcmp.eq.s32.totalorder %v643, 0
        %vm708 = vcmp.eq.s32.totalorder %v644, 0
        %vm709 = vcmp.eq.s32.totalorder %v645, 0
        %vm710 = vcmp.eq.s32.totalorder %v646, 0
        %vm711 = vcmp.eq.s32.totalorder %v647, 0
        %vm712 = vcmp.eq.s32.totalorder %v648, 0
        %vm713 = vcmp.eq.s32.totalorder %v649, 0
        %vm714 = vcmp.eq.s32.totalorder %v650, 0
        %vm715 = vcmp.eq.s32.totalorder %v651, 0
        %vm716 = vcmp.eq.s32.totalorder %v652, 0
        %vm717 = vcmp.eq.s32.totalorder %v653, 0
        %v719 = vlaneseq
        %v720 = vshrl.u32 %v719, 7
        %v721 = vsub.s32 0, %v720
        %v722 = vrot.slane %v518, %v721
        %v723 = vlaneseq
        %v724 = vshrl.u32 %v723, 7
        %v725 = vsub.s32 1, %v724
        %v726 = vrot.slane %v518, %v725
        %v729 = vsel %vm654, %v722, 0.0
        %v730 = vsel %vm655, %v726, 0.0
        %v731 = vsel %vm656, %v722, 0.0
        %v732 = vsel %vm657, %v726, 0.0
        %v733 = vsel %vm658, %v722, 0.0
        %v734 = vsel %vm659, %v726, 0.0
        %v735 = vsel %vm660, %v722, 0.0
        %v736 = vsel %vm661, %v726, 0.0
        %v737 = vsel %vm662, %v722, 0.0
        %v738 = vsel %vm663, %v726, 0.0
        %v739 = vsel %vm664, %v722, 0.0
        %v740 = vsel %vm665, %v726, 0.0
        %v741 = vsel %vm666, %v722, 0.0
        %v742 = vsel %vm667, %v726, 0.0
        %v743 = vsel %vm668, %v722, 0.0
        %v744 = vsel %vm669, %v726, 0.0
        %v745 = vsel %vm670, %v722, 0.0
        %v746 = vsel %vm671, %v726, 0.0
        %v747 = vsel %vm672, %v722, 0.0
        %v748 = vsel %vm673, %v726, 0.0
        %v749 = vsel %vm674, %v722, 0.0
        %v750 = vsel %vm675, %v726, 0.0
        %v751 = vsel %vm676, %v722, 0.0
        %v752 = vsel %vm677, %v726, 0.0
        %v753 = vsel %vm678, %v722, 0.0
        %v754 = vsel %vm679, %v726, 0.0
        %v755 = vsel %vm680, %v722, 0.0
        %v756 = vsel %vm681, %v726, 0.0
        %v757 = vsel %vm682, %v722, 0.0
        %v758 = vsel %vm683, %v726, 0.0
        %v759 = vsel %vm684, %v722, 0.0
        %v760 = vsel %vm685, %v726, 0.0
        %v761 = vsel %vm686, %v722, 0.0
        %v762 = vsel %vm687, %v726, 0.0
        %v763 = vsel %vm688, %v722, 0.0
        %v764 = vsel %vm689, %v726, 0.0
        %v765 = vsel %vm690, %v722, 0.0
        %v766 = vsel %vm691, %v726, 0.0
        %v767 = vsel %vm692, %v722, 0.0
        %v768 = vsel %vm693, %v726, 0.0
        %v769 = vsel %vm694, %v722, 0.0
        %v770 = vsel %vm695, %v726, 0.0
        %v771 = vsel %vm696, %v722, 0.0
        %v772 = vsel %vm697, %v726, 0.0
        %v773 = vsel %vm698, %v722, 0.0
        %v774 = vsel %vm699, %v726, 0.0
        %v775 = vsel %vm700, %v722, 0.0
        %v776 = vsel %vm701, %v726, 0.0
        %v777 = vsel %vm702, %v722, 0.0
        %v778 = vsel %vm703, %v726, 0.0
        %v779 = vsel %vm704, %v722, 0.0
        %v780 = vsel %vm705, %v726, 0.0
        %v781 = vsel %vm706, %v722, 0.0
        %v782 = vsel %vm707, %v726, 0.0
        %v783 = vsel %vm708, %v722, 0.0
        %v784 = vsel %vm709, %v726, 0.0
        %v785 = vsel %vm710, %v722, 0.0
        %v786 = vsel %vm711, %v726, 0.0
        %v787 = vsel %vm712, %v722, 0.0
        %v788 = vsel %vm713, %v726, 0.0
        %v789 = vsel %vm714, %v722, 0.0
        %v790 = vsel %vm715, %v726, 0.0
        %v791 = vsel %vm716, %v722, 0.0
        %v792 = vsel %vm717, %v726, 0.0
        %vm793 = vcmp.eq.s32.totalorder %v590, 1
        %vm794 = vcmp.eq.s32.totalorder %v591, 1
        %vm795 = vcmp.eq.s32.totalorder %v592, 1
        %vm796 = vcmp.eq.s32.totalorder %v593, 1
        %vm797 = vcmp.eq.s32.totalorder %v594, 1
        %vm798 = vcmp.eq.s32.totalorder %v595, 1
        %vm799 = vcmp.eq.s32.totalorder %v596, 1
        %vm800 = vcmp.eq.s32.totalorder %v597, 1
        %vm801 = vcmp.eq.s32.totalorder %v598, 1
        %vm802 = vcmp.eq.s32.totalorder %v599, 1
        %vm803 = vcmp.eq.s32.totalorder %v600, 1
        %vm804 = vcmp.eq.s32.totalorder %v601, 1
        %vm805 = vcmp.eq.s32.totalorder %v602, 1
        %vm806 = vcmp.eq.s32.totalorder %v603, 1
        %vm807 = vcmp.eq.s32.totalorder %v604, 1
        %vm808 = vcmp.eq.s32.totalorder %v605, 1
        %vm809 = vcmp.eq.s32.totalorder %v606, 1
        %vm810 = vcmp.eq.s32.totalorder %v607, 1
        %vm811 = vcmp.eq.s32.totalorder %v608, 1
        %vm812 = vcmp.eq.s32.totalorder %v609, 1
        %vm813 = vcmp.eq.s32.totalorder %v610, 1
        %vm814 = vcmp.eq.s32.totalorder %v611, 1
        %vm815 = vcmp.eq.s32.totalorder %v612, 1
        %vm816 = vcmp.eq.s32.totalorder %v613, 1
        %vm817 = vcmp.eq.s32.totalorder %v614, 1
        %vm818 = vcmp.eq.s32.totalorder %v615, 1
        %vm819 = vcmp.eq.s32.totalorder %v616, 1
        %vm820 = vcmp.eq.s32.totalorder %v617, 1
        %vm821 = vcmp.eq.s32.totalorder %v618, 1
        %vm822 = vcmp.eq.s32.totalorder %v619, 1
        %vm823 = vcmp.eq.s32.totalorder %v620, 1
        %vm824 = vcmp.eq.s32.totalorder %v621, 1
        %vm825 = vcmp.eq.s32.totalorder %v622, 1
        %vm826 = vcmp.eq.s32.totalorder %v623, 1
        %vm827 = vcmp.eq.s32.totalorder %v624, 1
        %vm828 = vcmp.eq.s32.totalorder %v625, 1
        %vm829 = vcmp.eq.s32.totalorder %v626, 1
        %vm830 = vcmp.eq.s32.totalorder %v627, 1
        %vm831 = vcmp.eq.s32.totalorder %v628, 1
        %vm832 = vcmp.eq.s32.totalorder %v629, 1
        %vm833 = vcmp.eq.s32.totalorder %v630, 1
        %vm834 = vcmp.eq.s32.totalorder %v631, 1
        %vm835 = vcmp.eq.s32.totalorder %v632, 1
        %vm836 = vcmp.eq.s32.totalorder %v633, 1
        %vm837 = vcmp.eq.s32.totalorder %v634, 1
        %vm838 = vcmp.eq.s32.totalorder %v635, 1
        %vm839 = vcmp.eq.s32.totalorder %v636, 1
        %vm840 = vcmp.eq.s32.totalorder %v637, 1
        %vm841 = vcmp.eq.s32.totalorder %v638, 1
        %vm842 = vcmp.eq.s32.totalorder %v639, 1
        %vm843 = vcmp.eq.s32.totalorder %v640, 1
        %vm844 = vcmp.eq.s32.totalorder %v641, 1
        %vm845 = vcmp.eq.s32.totalorder %v642, 1
        %vm846 = vcmp.eq.s32.totalorder %v643, 1
        %vm847 = vcmp.eq.s32.totalorder %v644, 1
        %vm848 = vcmp.eq.s32.totalorder %v645, 1
        %vm849 = vcmp.eq.s32.totalorder %v646, 1
        %vm850 = vcmp.eq.s32.totalorder %v647, 1
        %vm851 = vcmp.eq.s32.totalorder %v648, 1
        %vm852 = vcmp.eq.s32.totalorder %v649, 1
        %vm853 = vcmp.eq.s32.totalorder %v650, 1
        %vm854 = vcmp.eq.s32.totalorder %v651, 1
        %vm855 = vcmp.eq.s32.totalorder %v652, 1
        %vm856 = vcmp.eq.s32.totalorder %v653, 1
        %v858 = vlaneseq
        %v859 = vshrl.u32 %v858, 7
        %v860 = vsub.s32 0, %v859
        %v861 = vrot.slane %v521, %v860
        %v862 = vlaneseq
        %v863 = vshrl.u32 %v862, 7
        %v864 = vsub.s32 1, %v863
        %v865 = vrot.slane %v521, %v864
        %v868 = vsel %vm793, %v861, 0.0
        %v869 = vsel %vm794, %v865, 0.0
        %v870 = vsel %vm795, %v861, 0.0
        %v871 = vsel %vm796, %v865, 0.0
        %v872 = vsel %vm797, %v861, 0.0
        %v873 = vsel %vm798, %v865, 0.0
        %v874 = vsel %vm799, %v861, 0.0
        %v875 = vsel %vm800, %v865, 0.0
        %v876 = vsel %vm801, %v861, 0.0
        %v877 = vsel %vm802, %v865, 0.0
        %v878 = vsel %vm803, %v861, 0.0
        %v879 = vsel %vm804, %v865, 0.0
        %v880 = vsel %vm805, %v861, 0.0
        %v881 = vsel %vm806, %v865, 0.0
        %v882 = vsel %vm807, %v861, 0.0
        %v883 = vsel %vm808, %v865, 0.0
        %v884 = vsel %vm809, %v861, 0.0
        %v885 = vsel %vm810, %v865, 0.0
        %v886 = vsel %vm811, %v861, 0.0
        %v887 = vsel %vm812, %v865, 0.0
        %v888 = vsel %vm813, %v861, 0.0
        %v889 = vsel %vm814, %v865, 0.0
        %v890 = vsel %vm815, %v861, 0.0
        %v891 = vsel %vm816, %v865, 0.0
        %v892 = vsel %vm817, %v861, 0.0
        %v893 = vsel %vm818, %v865, 0.0
        %v894 = vsel %vm819, %v861, 0.0
        %v895 = vsel %vm820, %v865, 0.0
        %v896 = vsel %vm821, %v861, 0.0
        %v897 = vsel %vm822, %v865, 0.0
        %v898 = vsel %vm823, %v861, 0.0
        %v899 = vsel %vm824, %v865, 0.0
        %v900 = vsel %vm825, %v861, 0.0
        %v901 = vsel %vm826, %v865, 0.0
        %v902 = vsel %vm827, %v861, 0.0
        %v903 = vsel %vm828, %v865, 0.0
        %v904 = vsel %vm829, %v861, 0.0
        %v905 = vsel %vm830, %v865, 0.0
        %v906 = vsel %vm831, %v861, 0.0
        %v907 = vsel %vm832, %v865, 0.0
        %v908 = vsel %vm833, %v861, 0.0
        %v909 = vsel %vm834, %v865, 0.0
        %v910 = vsel %vm835, %v861, 0.0
        %v911 = vsel %vm836, %v865, 0.0
        %v912 = vsel %vm837, %v861, 0.0
        %v913 = vsel %vm838, %v865, 0.0
        %v914 = vsel %vm839, %v861, 0.0
        %v915 = vsel %vm840, %v865, 0.0
        %v916 = vsel %vm841, %v861, 0.0
        %v917 = vsel %vm842, %v865, 0.0
        %v918 = vsel %vm843, %v861, 0.0
        %v919 = vsel %vm844, %v865, 0.0
        %v920 = vsel %vm845, %v861, 0.0
        %v921 = vsel %vm846, %v865, 0.0
        %v922 = vsel %vm847, %v861, 0.0
        %v923 = vsel %vm848, %v865, 0.0
        %v924 = vsel %vm849, %v861, 0.0
        %v925 = vsel %vm850, %v865, 0.0
        %v926 = vsel %vm851, %v861, 0.0
        %v927 = vsel %vm852, %v865, 0.0
        %v928 = vsel %vm853, %v861, 0.0
        %v929 = vsel %vm854, %v865, 0.0
        %v930 = vsel %vm855, %v861, 0.0
        %v931 = vsel %vm856, %v865, 0.0
        %v932 = vadd.f32 %v729, %v868
        %v933 = vadd.f32 %v730, %v869
        %v934 = vadd.f32 %v731, %v870
        %v935 = vadd.f32 %v732, %v871
        %v936 = vadd.f32 %v733, %v872
        %v937 = vadd.f32 %v734, %v873
        %v938 = vadd.f32 %v735, %v874
        %v939 = vadd.f32 %v736, %v875
        %v940 = vadd.f32 %v737, %v876
        %v941 = vadd.f32 %v738, %v877
        %v942 = vadd.f32 %v739, %v878
        %v943 = vadd.f32 %v740, %v879
        %v944 = vadd.f32 %v741, %v880
        %v945 = vadd.f32 %v742, %v881
        %v946 = vadd.f32 %v743, %v882
        %v947 = vadd.f32 %v744, %v883
        %v948 = vadd.f32 %v745, %v884
        %v949 = vadd.f32 %v746, %v885
        %v950 = vadd.f32 %v747, %v886
        %v951 = vadd.f32 %v748, %v887
        %v952 = vadd.f32 %v749, %v888
        %v953 = vadd.f32 %v750, %v889
        %v954 = vadd.f32 %v751, %v890
        %v955 = vadd.f32 %v752, %v891
        %v956 = vadd.f32 %v753, %v892
        %v957 = vadd.f32 %v754, %v893
        %v958 = vadd.f32 %v755, %v894
        %v959 = vadd.f32 %v756, %v895
        %v960 = vadd.f32 %v757, %v896
        %v961 = vadd.f32 %v758, %v897
        %v962 = vadd.f32 %v759, %v898
        %v963 = vadd.f32 %v760, %v899
        %v964 = vadd.f32 %v761, %v900
        %v965 = vadd.f32 %v762, %v901
        %v966 = vadd.f32 %v763, %v902
        %v967 = vadd.f32 %v764, %v903
        %v968 = vadd.f32 %v765, %v904
        %v969 = vadd.f32 %v766, %v905
        %v970 = vadd.f32 %v767, %v906
        %v971 = vadd.f32 %v768, %v907
        %v972 = vadd.f32 %v769, %v908
        %v973 = vadd.f32 %v770, %v909
        %v974 = vadd.f32 %v771, %v910
        %v975 = vadd.f32 %v772, %v911
        %v976 = vadd.f32 %v773, %v912
        %v977 = vadd.f32 %v774, %v913
        %v978 = vadd.f32 %v775, %v914
        %v979 = vadd.f32 %v776, %v915
        %v980 = vadd.f32 %v777, %v916
        %v981 = vadd.f32 %v778, %v917
        %v982 = vadd.f32 %v779, %v918
        %v983 = vadd.f32 %v780, %v919
        %v984 = vadd.f32 %v781, %v920
        %v985 = vadd.f32 %v782, %v921
        %v986 = vadd.f32 %v783, %v922
        %v987 = vadd.f32 %v784, %v923
        %v988 = vadd.f32 %v785, %v924
        %v989 = vadd.f32 %v786, %v925
        %v990 = vadd.f32 %v787, %v926
        %v991 = vadd.f32 %v788, %v927
        %v992 = vadd.f32 %v789, %v928
        %v993 = vadd.f32 %v790, %v929
        %v994 = vadd.f32 %v791, %v930
        %v995 = vadd.f32 %v792, %v931
        %vm996 = vcmp.eq.s32.totalorder %v590, 16
        %vm997 = vcmp.eq.s32.totalorder %v591, 16
        %vm998 = vcmp.eq.s32.totalorder %v592, 16
        %vm999 = vcmp.eq.s32.totalorder %v593, 16
        %vm1000 = vcmp.eq.s32.totalorder %v594, 16
        %vm1001 = vcmp.eq.s32.totalorder %v595, 16
        %vm1002 = vcmp.eq.s32.totalorder %v596, 16
        %vm1003 = vcmp.eq.s32.totalorder %v597, 16
        %vm1004 = vcmp.eq.s32.totalorder %v598, 16
        %vm1005 = vcmp.eq.s32.totalorder %v599, 16
        %vm1006 = vcmp.eq.s32.totalorder %v600, 16
        %vm1007 = vcmp.eq.s32.totalorder %v601, 16
        %vm1008 = vcmp.eq.s32.totalorder %v602, 16
        %vm1009 = vcmp.eq.s32.totalorder %v603, 16
        %vm1010 = vcmp.eq.s32.totalorder %v604, 16
        %vm1011 = vcmp.eq.s32.totalorder %v605, 16
        %vm1012 = vcmp.eq.s32.totalorder %v606, 16
        %vm1013 = vcmp.eq.s32.totalorder %v607, 16
        %vm1014 = vcmp.eq.s32.totalorder %v608, 16
        %vm1015 = vcmp.eq.s32.totalorder %v609, 16
        %vm1016 = vcmp.eq.s32.totalorder %v610, 16
        %vm1017 = vcmp.eq.s32.totalorder %v611, 16
        %vm1018 = vcmp.eq.s32.totalorder %v612, 16
        %vm1019 = vcmp.eq.s32.totalorder %v613, 16
        %vm1020 = vcmp.eq.s32.totalorder %v614, 16
        %vm1021 = vcmp.eq.s32.totalorder %v615, 16
        %vm1022 = vcmp.eq.s32.totalorder %v616, 16
        %vm1023 = vcmp.eq.s32.totalorder %v617, 16
        %vm1024 = vcmp.eq.s32.totalorder %v618, 16
        %vm1025 = vcmp.eq.s32.totalorder %v619, 16
        %vm1026 = vcmp.eq.s32.totalorder %v620, 16
        %vm1027 = vcmp.eq.s32.totalorder %v621, 16
        %vm1028 = vcmp.eq.s32.totalorder %v622, 16
        %vm1029 = vcmp.eq.s32.totalorder %v623, 16
        %vm1030 = vcmp.eq.s32.totalorder %v624, 16
        %vm1031 = vcmp.eq.s32.totalorder %v625, 16
        %vm1032 = vcmp.eq.s32.totalorder %v626, 16
        %vm1033 = vcmp.eq.s32.totalorder %v627, 16
        %vm1034 = vcmp.eq.s32.totalorder %v628, 16
        %vm1035 = vcmp.eq.s32.totalorder %v629, 16
        %vm1036 = vcmp.eq.s32.totalorder %v630, 16
        %vm1037 = vcmp.eq.s32.totalorder %v631, 16
        %vm1038 = vcmp.eq.s32.totalorder %v632, 16
        %vm1039 = vcmp.eq.s32.totalorder %v633, 16
        %vm1040 = vcmp.eq.s32.totalorder %v634, 16
        %vm1041 = vcmp.eq.s32.totalorder %v635, 16
        %vm1042 = vcmp.eq.s32.totalorder %v636, 16
        %vm1043 = vcmp.eq.s32.totalorder %v637, 16
        %vm1044 = vcmp.eq.s32.totalorder %v638, 16
        %vm1045 = vcmp.eq.s32.totalorder %v639, 16
        %vm1046 = vcmp.eq.s32.totalorder %v640, 16
        %vm1047 = vcmp.eq.s32.totalorder %v641, 16
        %vm1048 = vcmp.eq.s32.totalorder %v642, 16
        %vm1049 = vcmp.eq.s32.totalorder %v643, 16
        %vm1050 = vcmp.eq.s32.totalorder %v644, 16
        %vm1051 = vcmp.eq.s32.totalorder %v645, 16
        %vm1052 = vcmp.eq.s32.totalorder %v646, 16
        %vm1053 = vcmp.eq.s32.totalorder %v647, 16
        %vm1054 = vcmp.eq.s32.totalorder %v648, 16
        %vm1055 = vcmp.eq.s32.totalorder %v649, 16
        %vm1056 = vcmp.eq.s32.totalorder %v650, 16
        %vm1057 = vcmp.eq.s32.totalorder %v651, 16
        %vm1058 = vcmp.eq.s32.totalorder %v652, 16
        %vm1059 = vcmp.eq.s32.totalorder %v653, 16
        %v1061 = vlaneseq
        %v1062 = vshrl.u32 %v1061, 7
        %v1063 = vsub.s32 0, %v1062
        %v1064 = vrot.slane %v524, %v1063
        %v1065 = vlaneseq
        %v1066 = vshrl.u32 %v1065, 7
        %v1067 = vsub.s32 1, %v1066
        %v1068 = vrot.slane %v524, %v1067
        %v1071 = vsel %vm996, %v1064, 0.0
        %v1072 = vsel %vm997, %v1068, 0.0
        %v1073 = vsel %vm998, %v1064, 0.0
        %v1074 = vsel %vm999, %v1068, 0.0
        %v1075 = vsel %vm1000, %v1064, 0.0
        %v1076 = vsel %vm1001, %v1068, 0.0
        %v1077 = vsel %vm1002, %v1064, 0.0
        %v1078 = vsel %vm1003, %v1068, 0.0
        %v1079 = vsel %vm1004, %v1064, 0.0
        %v1080 = vsel %vm1005, %v1068, 0.0
        %v1081 = vsel %vm1006, %v1064, 0.0
        %v1082 = vsel %vm1007, %v1068, 0.0
        %v1083 = vsel %vm1008, %v1064, 0.0
        %v1084 = vsel %vm1009, %v1068, 0.0
        %v1085 = vsel %vm1010, %v1064, 0.0
        %v1086 = vsel %vm1011, %v1068, 0.0
        %v1087 = vsel %vm1012, %v1064, 0.0
        %v1088 = vsel %vm1013, %v1068, 0.0
        %v1089 = vsel %vm1014, %v1064, 0.0
        %v1090 = vsel %vm1015, %v1068, 0.0
        %v1091 = vsel %vm1016, %v1064, 0.0
        %v1092 = vsel %vm1017, %v1068, 0.0
        %v1093 = vsel %vm1018, %v1064, 0.0
        %v1094 = vsel %vm1019, %v1068, 0.0
        %v1095 = vsel %vm1020, %v1064, 0.0
        %v1096 = vsel %vm1021, %v1068, 0.0
        %v1097 = vsel %vm1022, %v1064, 0.0
        %v1098 = vsel %vm1023, %v1068, 0.0
        %v1099 = vsel %vm1024, %v1064, 0.0
        %v1100 = vsel %vm1025, %v1068, 0.0
        %v1101 = vsel %vm1026, %v1064, 0.0
        %v1102 = vsel %vm1027, %v1068, 0.0
        %v1103 = vsel %vm1028, %v1064, 0.0
        %v1104 = vsel %vm1029, %v1068, 0.0
        %v1105 = vsel %vm1030, %v1064, 0.0
        %v1106 = vsel %vm1031, %v1068, 0.0
        %v1107 = vsel %vm1032, %v1064, 0.0
        %v1108 = vsel %vm1033, %v1068, 0.0
        %v1109 = vsel %vm1034, %v1064, 0.0
        %v1110 = vsel %vm1035, %v1068, 0.0
        %v1111 = vsel %vm1036, %v1064, 0.0
        %v1112 = vsel %vm1037, %v1068, 0.0
        %v1113 = vsel %vm1038, %v1064, 0.0
        %v1114 = vsel %vm1039, %v1068, 0.0
        %v1115 = vsel %vm1040, %v1064, 0.0
        %v1116 = vsel %vm1041, %v1068, 0.0
        %v1117 = vsel %vm1042, %v1064, 0.0
        %v1118 = vsel %vm1043, %v1068, 0.0
        %v1119 = vsel %vm1044, %v1064, 0.0
        %v1120 = vsel %vm1045, %v1068, 0.0
        %v1121 = vsel %vm1046, %v1064, 0.0
        %v1122 = vsel %vm1047, %v1068, 0.0
        %v1123 = vsel %vm1048, %v1064, 0.0
        %v1124 = vsel %vm1049, %v1068, 0.0
        %v1125 = vsel %vm1050, %v1064, 0.0
        %v1126 = vsel %vm1051, %v1068, 0.0
        %v1127 = vsel %vm1052, %v1064, 0.0
        %v1128 = vsel %vm1053, %v1068, 0.0
        %v1129 = vsel %vm1054, %v1064, 0.0
        %v1130 = vsel %vm1055, %v1068, 0.0
        %v1131 = vsel %vm1056, %v1064, 0.0
        %v1132 = vsel %vm1057, %v1068, 0.0
        %v1133 = vsel %vm1058, %v1064, 0.0
        %v1134 = vsel %vm1059, %v1068, 0.0
        %v1135 = vadd.f32 %v932, %v1071
        %v1136 = vadd.f32 %v933, %v1072
        %v1137 = vadd.f32 %v934, %v1073
        %v1138 = vadd.f32 %v935, %v1074
        %v1139 = vadd.f32 %v936, %v1075
        %v1140 = vadd.f32 %v937, %v1076
        %v1141 = vadd.f32 %v938, %v1077
        %v1142 = vadd.f32 %v939, %v1078
        %v1143 = vadd.f32 %v940, %v1079
        %v1144 = vadd.f32 %v941, %v1080
        %v1145 = vadd.f32 %v942, %v1081
        %v1146 = vadd.f32 %v943, %v1082
        %v1147 = vadd.f32 %v944, %v1083
        %v1148 = vadd.f32 %v945, %v1084
        %v1149 = vadd.f32 %v946, %v1085
        %v1150 = vadd.f32 %v947, %v1086
        %v1151 = vadd.f32 %v948, %v1087
        %v1152 = vadd.f32 %v949, %v1088
        %v1153 = vadd.f32 %v950, %v1089
        %v1154 = vadd.f32 %v951, %v1090
        %v1155 = vadd.f32 %v952, %v1091
        %v1156 = vadd.f32 %v953, %v1092
        %v1157 = vadd.f32 %v954, %v1093
        %v1158 = vadd.f32 %v955, %v1094
        %v1159 = vadd.f32 %v956, %v1095
        %v1160 = vadd.f32 %v957, %v1096
        %v1161 = vadd.f32 %v958, %v1097
        %v1162 = vadd.f32 %v959, %v1098
        %v1163 = vadd.f32 %v960, %v1099
        %v1164 = vadd.f32 %v961, %v1100
        %v1165 = vadd.f32 %v962, %v1101
        %v1166 = vadd.f32 %v963, %v1102
        %v1167 = vadd.f32 %v964, %v1103
        %v1168 = vadd.f32 %v965, %v1104
        %v1169 = vadd.f32 %v966, %v1105
        %v1170 = vadd.f32 %v967, %v1106
        %v1171 = vadd.f32 %v968, %v1107
        %v1172 = vadd.f32 %v969, %v1108
        %v1173 = vadd.f32 %v970, %v1109
        %v1174 = vadd.f32 %v971, %v1110
        %v1175 = vadd.f32 %v972, %v1111
        %v1176 = vadd.f32 %v973, %v1112
        %v1177 = vadd.f32 %v974, %v1113
        %v1178 = vadd.f32 %v975, %v1114
        %v1179 = vadd.f32 %v976, %v1115
        %v1180 = vadd.f32 %v977, %v1116
        %v1181 = vadd.f32 %v978, %v1117
        %v1182 = vadd.f32 %v979, %v1118
        %v1183 = vadd.f32 %v980, %v1119
        %v1184 = vadd.f32 %v981, %v1120
        %v1185 = vadd.f32 %v982, %v1121
        %v1186 = vadd.f32 %v983, %v1122
        %v1187 = vadd.f32 %v984, %v1123
        %v1188 = vadd.f32 %v985, %v1124
        %v1189 = vadd.f32 %v986, %v1125
        %v1190 = vadd.f32 %v987, %v1126
        %v1191 = vadd.f32 %v988, %v1127
        %v1192 = vadd.f32 %v989, %v1128
        %v1193 = vadd.f32 %v990, %v1129
        %v1194 = vadd.f32 %v991, %v1130
        %v1195 = vadd.f32 %v992, %v1131
        %v1196 = vadd.f32 %v993, %v1132
        %v1197 = vadd.f32 %v994, %v1133
        %v1198 = vadd.f32 %v995, %v1134
        %vm1199 = vcmp.eq.s32.totalorder %v590, 17
        %vm1200 = vcmp.eq.s32.totalorder %v591, 17
        %vm1201 = vcmp.eq.s32.totalorder %v592, 17
        %vm1202 = vcmp.eq.s32.totalorder %v593, 17
        %vm1203 = vcmp.eq.s32.totalorder %v594, 17
        %vm1204 = vcmp.eq.s32.totalorder %v595, 17
        %vm1205 = vcmp.eq.s32.totalorder %v596, 17
        %vm1206 = vcmp.eq.s32.totalorder %v597, 17
        %vm1207 = vcmp.eq.s32.totalorder %v598, 17
        %vm1208 = vcmp.eq.s32.totalorder %v599, 17
        %vm1209 = vcmp.eq.s32.totalorder %v600, 17
        %vm1210 = vcmp.eq.s32.totalorder %v601, 17
        %vm1211 = vcmp.eq.s32.totalorder %v602, 17
        %vm1212 = vcmp.eq.s32.totalorder %v603, 17
        %vm1213 = vcmp.eq.s32.totalorder %v604, 17
        %vm1214 = vcmp.eq.s32.totalorder %v605, 17
        %vm1215 = vcmp.eq.s32.totalorder %v606, 17
        %vm1216 = vcmp.eq.s32.totalorder %v607, 17
        %vm1217 = vcmp.eq.s32.totalorder %v608, 17
        %vm1218 = vcmp.eq.s32.totalorder %v609, 17
        %vm1219 = vcmp.eq.s32.totalorder %v610, 17
        %vm1220 = vcmp.eq.s32.totalorder %v611, 17
        %vm1221 = vcmp.eq.s32.totalorder %v612, 17
        %vm1222 = vcmp.eq.s32.totalorder %v613, 17
        %vm1223 = vcmp.eq.s32.totalorder %v614, 17
        %vm1224 = vcmp.eq.s32.totalorder %v615, 17
        %vm1225 = vcmp.eq.s32.totalorder %v616, 17
        %vm1226 = vcmp.eq.s32.totalorder %v617, 17
        %vm1227 = vcmp.eq.s32.totalorder %v618, 17
        %vm1228 = vcmp.eq.s32.totalorder %v619, 17
        %vm1229 = vcmp.eq.s32.totalorder %v620, 17
        %vm1230 = vcmp.eq.s32.totalorder %v621, 17
        %vm1231 = vcmp.eq.s32.totalorder %v622, 17
        %vm1232 = vcmp.eq.s32.totalorder %v623, 17
        %vm1233 = vcmp.eq.s32.totalorder %v624, 17
        %vm1234 = vcmp.eq.s32.totalorder %v625, 17
        %vm1235 = vcmp.eq.s32.totalorder %v626, 17
        %vm1236 = vcmp.eq.s32.totalorder %v627, 17
        %vm1237 = vcmp.eq.s32.totalorder %v628, 17
        %vm1238 = vcmp.eq.s32.totalorder %v629, 17
        %vm1239 = vcmp.eq.s32.totalorder %v630, 17
        %vm1240 = vcmp.eq.s32.totalorder %v631, 17
        %vm1241 = vcmp.eq.s32.totalorder %v632, 17
        %vm1242 = vcmp.eq.s32.totalorder %v633, 17
        %vm1243 = vcmp.eq.s32.totalorder %v634, 17
        %vm1244 = vcmp.eq.s32.totalorder %v635, 17
        %vm1245 = vcmp.eq.s32.totalorder %v636, 17
        %vm1246 = vcmp.eq.s32.totalorder %v637, 17
        %vm1247 = vcmp.eq.s32.totalorder %v638, 17
        %vm1248 = vcmp.eq.s32.totalorder %v639, 17
        %vm1249 = vcmp.eq.s32.totalorder %v640, 17
        %vm1250 = vcmp.eq.s32.totalorder %v641, 17
        %vm1251 = vcmp.eq.s32.totalorder %v642, 17
        %vm1252 = vcmp.eq.s32.totalorder %v643, 17
        %vm1253 = vcmp.eq.s32.totalorder %v644, 17
        %vm1254 = vcmp.eq.s32.totalorder %v645, 17
        %vm1255 = vcmp.eq.s32.totalorder %v646, 17
        %vm1256 = vcmp.eq.s32.totalorder %v647, 17
        %vm1257 = vcmp.eq.s32.totalorder %v648, 17
        %vm1258 = vcmp.eq.s32.totalorder %v649, 17
        %vm1259 = vcmp.eq.s32.totalorder %v650, 17
        %vm1260 = vcmp.eq.s32.totalorder %v651, 17
        %vm1261 = vcmp.eq.s32.totalorder %v652, 17
        %vm1262 = vcmp.eq.s32.totalorder %v653, 17
        %v1264 = vlaneseq
        %v1265 = vshrl.u32 %v1264, 7
        %v1266 = vsub.s32 0, %v1265
        %v1267 = vrot.slane %v527, %v1266
        %v1268 = vlaneseq
        %v1269 = vshrl.u32 %v1268, 7
        %v1270 = vsub.s32 1, %v1269
        %v1271 = vrot.slane %v527, %v1270
        %v1274 = vsel %vm1199, %v1267, 0.0
        %v1275 = vsel %vm1200, %v1271, 0.0
        %v1276 = vsel %vm1201, %v1267, 0.0
        %v1277 = vsel %vm1202, %v1271, 0.0
        %v1278 = vsel %vm1203, %v1267, 0.0
        %v1279 = vsel %vm1204, %v1271, 0.0
        %v1280 = vsel %vm1205, %v1267, 0.0
        %v1281 = vsel %vm1206, %v1271, 0.0
        %v1282 = vsel %vm1207, %v1267, 0.0
        %v1283 = vsel %vm1208, %v1271, 0.0
        %v1284 = vsel %vm1209, %v1267, 0.0
        %v1285 = vsel %vm1210, %v1271, 0.0
        %v1286 = vsel %vm1211, %v1267, 0.0
        %v1287 = vsel %vm1212, %v1271, 0.0
        %v1288 = vsel %vm1213, %v1267, 0.0
        %v1289 = vsel %vm1214, %v1271, 0.0
        %v1290 = vsel %vm1215, %v1267, 0.0
        %v1291 = vsel %vm1216, %v1271, 0.0
        %v1292 = vsel %vm1217, %v1267, 0.0
        %v1293 = vsel %vm1218, %v1271, 0.0
        %v1294 = vsel %vm1219, %v1267, 0.0
        %v1295 = vsel %vm1220, %v1271, 0.0
        %v1296 = vsel %vm1221, %v1267, 0.0
        %v1297 = vsel %vm1222, %v1271, 0.0
        %v1298 = vsel %vm1223, %v1267, 0.0
        %v1299 = vsel %vm1224, %v1271, 0.0
        %v1300 = vsel %vm1225, %v1267, 0.0
        %v1301 = vsel %vm1226, %v1271, 0.0
        %v1302 = vsel %vm1227, %v1267, 0.0
        %v1303 = vsel %vm1228, %v1271, 0.0
        %v1304 = vsel %vm1229, %v1267, 0.0
        %v1305 = vsel %vm1230, %v1271, 0.0
        %v1306 = vsel %vm1231, %v1267, 0.0
        %v1307 = vsel %vm1232, %v1271, 0.0
        %v1308 = vsel %vm1233, %v1267, 0.0
        %v1309 = vsel %vm1234, %v1271, 0.0
        %v1310 = vsel %vm1235, %v1267, 0.0
        %v1311 = vsel %vm1236, %v1271, 0.0
        %v1312 = vsel %vm1237, %v1267, 0.0
        %v1313 = vsel %vm1238, %v1271, 0.0
        %v1314 = vsel %vm1239, %v1267, 0.0
        %v1315 = vsel %vm1240, %v1271, 0.0
        %v1316 = vsel %vm1241, %v1267, 0.0
        %v1317 = vsel %vm1242, %v1271, 0.0
        %v1318 = vsel %vm1243, %v1267, 0.0
        %v1319 = vsel %vm1244, %v1271, 0.0
        %v1320 = vsel %vm1245, %v1267, 0.0
        %v1321 = vsel %vm1246, %v1271, 0.0
        %v1322 = vsel %vm1247, %v1267, 0.0
        %v1323 = vsel %vm1248, %v1271, 0.0
        %v1324 = vsel %vm1249, %v1267, 0.0
        %v1325 = vsel %vm1250, %v1271, 0.0
        %v1326 = vsel %vm1251, %v1267, 0.0
        %v1327 = vsel %vm1252, %v1271, 0.0
        %v1328 = vsel %vm1253, %v1267, 0.0
        %v1329 = vsel %vm1254, %v1271, 0.0
        %v1330 = vsel %vm1255, %v1267, 0.0
        %v1331 = vsel %vm1256, %v1271, 0.0
        %v1332 = vsel %vm1257, %v1267, 0.0
        %v1333 = vsel %vm1258, %v1271, 0.0
        %v1334 = vsel %vm1259, %v1267, 0.0
        %v1335 = vsel %vm1260, %v1271, 0.0
        %v1336 = vsel %vm1261, %v1267, 0.0
        %v1337 = vsel %vm1262, %v1271, 0.0
        %v1338 = vadd.f32 %v1135, %v1274
        %v1339 = vadd.f32 %v1136, %v1275
        %v1340 = vadd.f32 %v1137, %v1276
        %v1341 = vadd.f32 %v1138, %v1277
        %v1342 = vadd.f32 %v1139, %v1278
        %v1343 = vadd.f32 %v1140, %v1279
        %v1344 = vadd.f32 %v1141, %v1280
        %v1345 = vadd.f32 %v1142, %v1281
        %v1346 = vadd.f32 %v1143, %v1282
        %v1347 = vadd.f32 %v1144, %v1283
        %v1348 = vadd.f32 %v1145, %v1284
        %v1349 = vadd.f32 %v1146, %v1285
        %v1350 = vadd.f32 %v1147, %v1286
        %v1351 = vadd.f32 %v1148, %v1287
        %v1352 = vadd.f32 %v1149, %v1288
        %v1353 = vadd.f32 %v1150, %v1289
        %v1354 = vadd.f32 %v1151, %v1290
        %v1355 = vadd.f32 %v1152, %v1291
        %v1356 = vadd.f32 %v1153, %v1292
        %v1357 = vadd.f32 %v1154, %v1293
        %v1358 = vadd.f32 %v1155, %v1294
        %v1359 = vadd.f32 %v1156, %v1295
        %v1360 = vadd.f32 %v1157, %v1296
        %v1361 = vadd.f32 %v1158, %v1297
        %v1362 = vadd.f32 %v1159, %v1298
        %v1363 = vadd.f32 %v1160, %v1299
        %v1364 = vadd.f32 %v1161, %v1300
        %v1365 = vadd.f32 %v1162, %v1301
        %v1366 = vadd.f32 %v1163, %v1302
        %v1367 = vadd.f32 %v1164, %v1303
        %v1368 = vadd.f32 %v1165, %v1304
        %v1369 = vadd.f32 %v1166, %v1305
        %v1370 = vadd.f32 %v1167, %v1306
        %v1371 = vadd.f32 %v1168, %v1307
        %v1372 = vadd.f32 %v1169, %v1308
        %v1373 = vadd.f32 %v1170, %v1309
        %v1374 = vadd.f32 %v1171, %v1310
        %v1375 = vadd.f32 %v1172, %v1311
        %v1376 = vadd.f32 %v1173, %v1312
        %v1377 = vadd.f32 %v1174, %v1313
        %v1378 = vadd.f32 %v1175, %v1314
        %v1379 = vadd.f32 %v1176, %v1315
        %v1380 = vadd.f32 %v1177, %v1316
        %v1381 = vadd.f32 %v1178, %v1317
        %v1382 = vadd.f32 %v1179, %v1318
        %v1383 = vadd.f32 %v1180, %v1319
        %v1384 = vadd.f32 %v1181, %v1320
        %v1385 = vadd.f32 %v1182, %v1321
        %v1386 = vadd.f32 %v1183, %v1322
        %v1387 = vadd.f32 %v1184, %v1323
        %v1388 = vadd.f32 %v1185, %v1324
        %v1389 = vadd.f32 %v1186, %v1325
        %v1390 = vadd.f32 %v1187, %v1326
        %v1391 = vadd.f32 %v1188, %v1327
        %v1392 = vadd.f32 %v1189, %v1328
        %v1393 = vadd.f32 %v1190, %v1329
        %v1394 = vadd.f32 %v1191, %v1330
        %v1395 = vadd.f32 %v1192, %v1331
        %v1396 = vadd.f32 %v1193, %v1332
        %v1397 = vadd.f32 %v1194, %v1333
        %v1398 = vadd.f32 %v1195, %v1334
        %v1399 = vadd.f32 %v1196, %v1335
        %v1400 = vadd.f32 %v1197, %v1336
        %v1401 = vadd.f32 %v1198, %v1337
        %v1402 = vld [vmem:[%s470] sm:$0xff]
        %v1404 = vcombine.high %v1402, %v1402
        %1406 = vmatprep.subr.mxu0 %v1339
        %1407 = vmatpush1.msra.mxu0 %v1338
        %1408 = vmatprep.subr.mxu0 %v1341
        %1409 = vmatpush1.msra.mxu0 %v1340
        %1410 = vmatprep.subr.mxu0 %v1343
        %1411 = vmatpush1.msra.mxu0 %v1342
        %1412 = vmatprep.subr.mxu0 %v1345
        %1413 = vmatpush1.msra.mxu0 %v1344
        %1414 = vmatprep.subr.mxu0 %v1347
        %1415 = vmatpush1.msra.mxu0 %v1346
        %1416 = vmatprep.subr.mxu0 %v1349
        %1417 = vmatpush1.msra.mxu0 %v1348
        %1418 = vmatprep.subr.mxu0 %v1351
        %1419 = vmatpush1.msra.mxu0 %v1350
        %1420 = vmatprep.subr.mxu0 %v1353
        %1421 = vmatpush1.msra.mxu0 %v1352
        %1422 = vmatprep.subr.mxu0 %v1355
        %1423 = vmatpush1.msra.mxu0 %v1354
        %1424 = vmatprep.subr.mxu0 %v1357
        %1425 = vmatpush1.msra.mxu0 %v1356
        %1426 = vmatprep.subr.mxu0 %v1359
        %1427 = vmatpush1.msra.mxu0 %v1358
        %1428 = vmatprep.subr.mxu0 %v1361
        %1429 = vmatpush1.msra.mxu0 %v1360
        %1430 = vmatprep.subr.mxu0 %v1363
        %1431 = vmatpush1.msra.mxu0 %v1362
        %1432 = vmatprep.subr.mxu0 %v1365
        %1433 = vmatpush1.msra.mxu0 %v1364
        %1434 = vmatprep.subr.mxu0 %v1367
        %1435 = vmatpush1.msra.mxu0 %v1366
        %1436 = vmatprep.subr.mxu0 %v1369
        %1437 = vmatpush1.msra.mxu0 %v1368
        %1438 = vmatprep.subr.mxu0 %v1371
        %1439 = vmatpush1.msra.mxu0 %v1370
        %1440 = vmatprep.subr.mxu0 %v1373
        %1441 = vmatpush1.msra.mxu0 %v1372
        %1442 = vmatprep.subr.mxu0 %v1375
        %1443 = vmatpush1.msra.mxu0 %v1374
        %1444 = vmatprep.subr.mxu0 %v1377
        %1445 = vmatpush1.msra.mxu0 %v1376
        %1446 = vmatprep.subr.mxu0 %v1379
        %1447 = vmatpush1.msra.mxu0 %v1378
        %1448 = vmatprep.subr.mxu0 %v1381
        %1449 = vmatpush1.msra.mxu0 %v1380
        %1450 = vmatprep.subr.mxu0 %v1383
        %1451 = vmatpush1.msra.mxu0 %v1382
        %1452 = vmatprep.subr.mxu0 %v1385
        %1453 = vmatpush1.msra.mxu0 %v1384
        %1454 = vmatprep.subr.mxu0 %v1387
        %1455 = vmatpush1.msra.mxu0 %v1386
        %1456 = vmatprep.subr.mxu0 %v1389
        %1457 = vmatpush1.msra.mxu0 %v1388
        %1458 = vmatprep.subr.mxu0 %v1391
        %1459 = vmatpush1.msra.mxu0 %v1390
        %1460 = vmatprep.subr.mxu0 %v1393
        %1461 = vmatpush1.msra.mxu0 %v1392
        %1462 = vmatprep.subr.mxu0 %v1395
        %1463 = vmatpush1.msra.mxu0 %v1394
        %1464 = vmatprep.subr.mxu0 %v1397
        %1465 = vmatpush1.msra.mxu0 %v1396
        %1466 = vmatprep.subr.mxu0 %v1399
        %1467 = vmatpush1.msra.mxu0 %v1398
        %1468 = vmatprep.subr.mxu0 %v1401
        %1469 = vmatpush1.msra.mxu0 %v1400
        %1470 = vmatprep.mubr.f32.mxu0 %v1404
        %1471 = vmatmul.mubr.f32.gmra.mrb[0].mxu0 %v1402
        %v1472 = vpop.f32.mrb[0].mxu0
        %v1473 = vadd.f32 0.0, %v1472
        %v1474 = vpop.f32.mrb[0].mxu0
        %v1475 = vadd.f32 0.0, %v1474
        %1476 = vdwg.mxu0
        %v1477 = vmul.f32 %v1473, %v536
        %v1478 = vmul.f32 %v1475, %v540
        %v1481 = vcombine.low %v1477, %v1478
        %1483 = vst [vmem:[%s456] sm:$0xff] %v1481
        %s1484 = sand.u32 %s216, 1
        %s1485 = scalar_lea.sflag [#allocation4], %s1484
        %s1486 = sand.u32 %s216, 1
        %s1487 = smul.addr %s1486, 8
        %s1488 = scalar_lea.vmem [#allocation10], %s1487
        %s1489 = sand.u32 %s244, 1
        %s1490 = scalar_lea.sflag [#allocation12], %s1489
        %s1491 = sand.u32 %s244, 1
        %s1492 = smul.addr %s1491, 8
        %s1493 = scalar_lea.vmem [#allocation11], %s1492
        // Predicated region
        $region61: #{tpu_custom_call.1} parent=43 // pred_check
          %p1494 = pneg %p226
        $region62: #{tpu_custom_call.1} parent=43 // pred_check_branch
          %1496 = sbr.rel (%p1494) target = $region64
        $region63: #{tpu_custom_call.1} parent=43 // pred_region
          %s1497 = smul.u32 2, %s37
          %s1499 = ssub.s32 128, 128
          %1500 = vsyncadd %s1485, %s1499
          %s1501 = smul.addr %s36, 2
          %s1502 = sadd.s32 %s1497, %s1501
          %s1503 = smul.addr %s1502, 64
          %s1504 = scalar_lea.hbm %s6, %s1503
          %s1506 = sshll.u32 %s1488, 4
          %s1507 = int_to_ptr.vmem [resolvable:$true] %s1506
          %1509 = dma.vmem_to_hbm [thread:$0]  %s1507, 128, %s1504, %s1485
        $region64: #{tpu_custom_call.1} parent=43 // pred_fallthru
          _
        // Predicated region
        $region65: #{tpu_custom_call.1} parent=43 // pred_check
          %p1510 = pneg %p254
        $region66: #{tpu_custom_call.1} parent=43 // pred_check_branch
          %1512 = sbr.rel (%p1510) target = $region68
        $region67: #{tpu_custom_call.1} parent=43 // pred_region
          %s1513 = smul.u32 2, %s37
          %s1515 = ssub.s32 128, 128
          %1516 = vsyncadd %s1490, %s1515
          %s1517 = smul.addr %s36, 2
          %s1518 = sadd.s32 %s1513, %s1517
          %s1519 = smul.addr %s1518, 64
          %s1520 = scalar_lea.hbm %s7, %s1519
          %s1522 = sshll.u32 %s1493, 4
          %s1523 = int_to_ptr.vmem [resolvable:$true] %s1522
          %1525 = dma.vmem_to_hbm [thread:$0]  %s1523, 128, %s1520, %s1490
        $region68: #{tpu_custom_call.1} parent=43 // pred_fallthru
          _
      $region44: #{tpu_custom_call.1} parent=5 // pred_fallthru
        _
      %p1526 = scmp.le.s32.totalorder 2, %s27
      // Predicated region
      $region69: #{tpu_custom_call.1} parent=5 // pred_check
        %p1527 = pneg %p1526
      $region70: #{tpu_custom_call.1} parent=5 // pred_check_branch
        %1529 = sbr.rel (%p1527) target = $region72
      $region71: #{tpu_custom_call.1} parent=5 // pred_region
        %s1530 = ssub.s32 %s27, 2
        // Predicated region
        $region73: #{tpu_custom_call.1} parent=71 // pred_check
          %p1531 = pneg %p232
        $region74: #{tpu_custom_call.1} parent=71 // pred_check_branch
          %1533 = sbr.rel (%p1531) target = $region76
        $region75: #{tpu_custom_call.1} parent=71 // pred_region
          %s1534 = sand.u32 %s217, 1
          %s1535 = scalar_lea.sflag [#allocation4], %s1534
          %s1536 = sand.u32 %s217, 1
          %s1537 = smul.addr %s1536, 8
          %s1538 = scalar_lea.vmem [#allocation10], %s1537
          %1539 = dma.done %s1535, 128
        $region76: #{tpu_custom_call.1} parent=71 // pred_fallthru
          _
        // Predicated region
        $region77: #{tpu_custom_call.1} parent=71 // pred_check
          %p1540 = pneg %p260
        $region78: #{tpu_custom_call.1} parent=71 // pred_check_branch
          %1542 = sbr.rel (%p1540) target = $region80
        $region79: #{tpu_custom_call.1} parent=71 // pred_region
          %s1543 = sand.u32 %s245, 1
          %s1544 = scalar_lea.sflag [#allocation12], %s1543
          %s1545 = sand.u32 %s245, 1
          %s1546 = smul.addr %s1545, 8
          %s1547 = scalar_lea.vmem [#allocation11], %s1546
          %1548 = dma.done %s1544, 128
        $region80: #{tpu_custom_call.1} parent=71 // pred_fallthru
          _
      $region72: #{tpu_custom_call.1} parent=5 // pred_fallthru
        _
    $region6: #{tpu_custom_call.1} parent=1 // loop_footer
      %s31 = sadd.s32 1, %s27
    $region7: #{tpu_custom_call.1} parent=1 // loop_footer_branch
      %26 = sbr.rel target = $region3
    $region8: #{tpu_custom_call.1} parent=1 // loop_exit
      _
    %1549 = vsyncpa [#allocation3], 1
    %s1550 = scalar_lea.sflag [#allocation3], 1
    %1551 = vsyncpa %s1550, 1
    %1552 = vsyncpa [#allocation6], 1
    %s1553 = scalar_lea.sflag [#allocation6], 1
    %1554 = vsyncpa %s1553, 1
    %1555 = vsyncpa [#allocation9], 1
    %s1556 = scalar_lea.sflag [#allocation9], 1
    %1557 = vsyncpa %s1556, 1
    %1558 = vsyncpa [#allocation4], 1
    %s1559 = scalar_lea.sflag [#allocation4], 1
    %1560 = vsyncpa %s1559, 1
    %1561 = vsyncpa [#allocation12], 1
    %s1562 = scalar_lea.sflag [#allocation12], 1
    %1563 = vsyncpa %s1562, 1

</llo_original>
